<compile_context>
chip_gen: v6e
topology: v6e:2x2x1
jax: 0.10.0
libtpu: 0.0.40
codegen_flags: <defaults>
</compile_context>

<pallas_src>
import jax
import jax.numpy as jnp
from jax.experimental import pallas as pl
from jax.experimental.pallas import tpu as pltpu

# ---------------- configuration (small, consistent with the module) ----------
B = 2            # batch
S = 8            # sequence length
D = 16           # model dim (d_model)
NH = 2           # attention heads
HD = D // NH     # head dim
STATE_DIM = S * D
HIDDEN = (32, 32)
ACTION_DIM = 4
LN_EPS = 1e-5    # PyTorch nn.LayerNorm default eps
SCALE = 1.0 / (HD ** 0.5)

WEIGHTS_FINAL_INIT = 0.003
BIAS_FINAL_INIT = 0.0003

SLAB_LANES = 128


# ---------------- parameter-slab layout (static, shared by init + kernel) ----
def _build_layout():
    entries = [
        ("wqkv", D, 3 * D),                # fused Q/K/V projection weight
        ("bqkv", 1, 3 * D),
        ("wo",   D, D),                    # attention output projection
        ("bo",   1, D),
        ("w1",   STATE_DIM, HIDDEN[0]),    # encoder-LN affine folded in
        ("b1",   1, HIDDEN[0]),
        ("g1",   1, HIDDEN[0]),            # ln1 gamma/beta (ReLU follows -> keep)
        ("bt1",  1, HIDDEN[0]),
        ("w2",   HIDDEN[0], HIDDEN[1]),
        ("b2",   1, HIDDEN[1]),
        ("g2",   1, HIDDEN[1]),
        ("bt2",  1, HIDDEN[1]),
        ("wms",  HIDDEN[1], 2 * ACTION_DIM),   # fused mu|sigma head
        ("bms",  1, 2 * ACTION_DIM),
    ]
    layout, off = {}, 0
    for name, rows, cols in entries:
        assert cols <= SLAB_LANES
        layout[name] = (off, rows, cols)
        off += -(-rows // 8) * 8           # 8-row (sublane) aligned sections
    return layout, off


_LAYOUT, SLAB_ROWS = _build_layout()


def _slab(ref, name):
    """Static (zero-cost) view + load of one parameter from the packed slab."""
    off, rows, cols = _LAYOUT[name]
    return ref[off:off + rows, 0:cols]


# ---------------- fused Actor forward kernel ---------------------------------
def actor_kernel(x_ref, slab_ref, eps_ref, out_ref):
    f32 = jnp.float32
    x3 = x_ref[...].astype(f32)                   # (B, S, D)
    x2 = x3.reshape(B * S, D)                     # leading-dim collapse (trivial)

    # ---- fused QKV projection: one (B*S, D) x (D, 3D) matmul ----
    qkv = jnp.dot(x2, _slab(slab_ref, "wqkv"),
                  preferred_element_type=f32) + _slab(slab_ref, "bqkv")
    q = qkv[:, 0 * D:1 * D].reshape(B, S, D)
    k = qkv[:, 1 * D:2 * D].reshape(B, S, D)
    v = qkv[:, 2 * D:3 * D].reshape(B, S, D)

    # ---- attention: static loop over NH=2 heads; accumulate the output
    #      projection per head (no ctx concat) ----
    wo_off, _, _ = _LAYOUT["wo"]
    attn = jnp.zeros((B * S, D), f32)
    for h in range(NH):
        sl = slice(h * HD, (h + 1) * HD)
        qh, kh, vh = q[:, :, sl], k[:, :, sl], v[:, :, sl]           # (B, S, HD)
        s = jnp.einsum("bqd,bkd->bqk", qh, kh,
                       preferred_element_type=f32) * SCALE           # (B, S, S)
        s = s - jnp.max(s, axis=-1, keepdims=True)
        p = jnp.exp(s)
        p = p / jnp.sum(p, axis=-1, keepdims=True)                   # exact softmax
        ctx_h = jnp.einsum("bqk,bkd->bqd", p, vh,
                           preferred_element_type=f32)               # (B, S, HD)
        wo_h = slab_ref[wo_off + h * HD: wo_off + (h + 1) * HD, 0:D]  # (HD, D)
        attn = attn + jnp.dot(ctx_h.reshape(B * S, HD), wo_h,
                              preferred_element_type=f32)
    attn = attn + _slab(slab_ref, "bo")

    # ---- residual + LayerNorm (affine folded into linear1 at init) ----
    y = x2 + attn
    m = jnp.mean(y, axis=-1, keepdims=True)
    var = jnp.mean((y - m) ** 2, axis=-1, keepdims=True)
    y = (y - m) * jax.lax.rsqrt(var + LN_EPS)
    y3 = y.reshape(B, S, D)

    # ---- linear1 as an accumulation of S tiny (B,D)x(D,H1) dots ----
    #      (replaces the explicit flatten + lane-concat chain)
    w1_off, _, _ = _LAYOUT["w1"]
    h1 = jnp.zeros((B, HIDDEN[0]), f32)
    for si in range(S):
        w1_s = slab_ref[w1_off + si * D: w1_off + (si + 1) * D, 0:HIDDEN[0]]
        h1 = h1 + jnp.dot(y3[:, si, :], w1_s, preferred_element_type=f32)
    h1 = h1 + _slab(slab_ref, "b1")

    # ---- LayerNorm1 + ReLU ----
    m = jnp.mean(h1, axis=-1, keepdims=True)
    var = jnp.mean((h1 - m) ** 2, axis=-1, keepdims=True)
    h1 = (h1 - m) * jax.lax.rsqrt(var + LN_EPS) * _slab(slab_ref, "g1") \
         + _slab(slab_ref, "bt1")
    h1 = jnp.maximum(h1, 0.0)

    # ---- linear2 + LayerNorm2 + ReLU ----
    h2 = jnp.dot(h1, _slab(slab_ref, "w2"),
                 preferred_element_type=f32) + _slab(slab_ref, "b2")
    m = jnp.mean(h2, axis=-1, keepdims=True)
    var = jnp.mean((h2 - m) ** 2, axis=-1, keepdims=True)
    h2 = (h2 - m) * jax.lax.rsqrt(var + LN_EPS) * _slab(slab_ref, "g2") \
         + _slab(slab_ref, "bt2")
    h2 = jnp.maximum(h2, 0.0)

    # ---- fused mu/sigma heads: one (B, H1) x (H1, 2A) matmul ----
    ms = jnp.dot(h2, _slab(slab_ref, "wms"),
                 preferred_element_type=f32) + _slab(slab_ref, "bms")
    mu = ms[:, :ACTION_DIM]
    sigma = ms[:, ACTION_DIM:]

    # reparameterize (std = exp(0.5*sigma), z = mu + eps*std) + tanh
    std = jnp.exp(0.5 * sigma)
    act = jnp.tanh(mu + eps_ref[...].astype(f32) * std)

    # single lane-packed output slab: [mu | std | action]
    out_ref[...] = jnp.concatenate([mu, std, act], axis=-1)


def actor_pallas(x, eps, slab):
    vspec = pl.BlockSpec(memory_space=pltpu.MemorySpace.VMEM)
    packed = pl.pallas_call(
        actor_kernel,
        in_specs=[vspec, vspec, vspec],
        out_specs=vspec,
        out_shape=jax.ShapeDtypeStruct((B, 3 * ACTION_DIM), jnp.float32),
    )(x, slab, eps)
    mu = packed[:, :ACTION_DIM]
    std = packed[:, ACTION_DIM:2 * ACTION_DIM]
    action = packed[:, 2 * ACTION_DIM:]
    return mu, std, action


@jax.jit
def actor_forward(x, eps, slab):
    return actor_pallas(x, eps, slab)


# ---------------- parameter initialization + host-side slab packing ----------
def init_params(key):
    ks = iter(jax.random.split(key, 16))
    nxt = lambda: next(ks)

    def uniform(shape, lo, hi):
        return jax.random.uniform(nxt(), shape, jnp.float32, lo, hi)

    def fan_in_uniform(shape, fan_in):
        # matches fan_in_uniform_init(tensor): fan_in = tensor.size(-1)
        w = 1.0 / (float(fan_in) ** 0.5)
        return uniform(shape, -w, w)

    # --- MHA encoder projections (weights stored [in, out], biases [1, out]) ---
    wq = fan_in_uniform((D, D), D); bq = fan_in_uniform((1, D), D)
    wk = fan_in_uniform((D, D), D); bk = fan_in_uniform((1, D), D)
    wv = fan_in_uniform((D, D), D); bv = fan_in_uniform((1, D), D)
    wqkv = jnp.concatenate([wq, wk, wv], axis=1)         # (D, 3D)
    bqkv = jnp.concatenate([bq, bk, bv], axis=1)         # (1, 3D)
    wo = fan_in_uniform((D, D), D); bo = fan_in_uniform((1, D), D)
    ln_g = jnp.ones((D,), jnp.float32)                   # encoder LN affine
    ln_b = jnp.zeros((D,), jnp.float32)

    # --- Actor MLP head ---
    w1 = fan_in_uniform((STATE_DIM, HIDDEN[0]), STATE_DIM)
    b1 = fan_in_uniform((1, HIDDEN[0]), HIDDEN[0])
    w2 = fan_in_uniform((HIDDEN[0], HIDDEN[1]), HIDDEN[0])
    b2 = fan_in_uniform((1, HIDDEN[1]), HIDDEN[1])
    wmu = fan_in_uniform((HIDDEN[1], ACTION_DIM), HIDDEN[1])
    bmu = fan_in_uniform((1, ACTION_DIM), ACTION_DIM)
    wsig = uniform((HIDDEN[1], ACTION_DIM), 0.0, WEIGHTS_FINAL_INIT)
    bsig = uniform((1, ACTION_DIM), 0.0, BIAS_FINAL_INIT)
    wms = jnp.concatenate([wmu, wsig], axis=1)            # (H1, 2A)
    bms = jnp.concatenate([bmu, bsig], axis=1)            # (1, 2A)

    # --- fold encoder LayerNorm affine into linear1 (flatten order: s*D + d) ---
    ge_t = jnp.tile(ln_g, S)[:, None]                     # (STATE_DIM, 1)
    be_t = jnp.tile(ln_b, S)[None, :]                     # (1, STATE_DIM)
    w1_f = w1 * ge_t
    b1_f = b1 + be_t @ w1

    # --- LN1 / LN2 affines (kept inside the kernel: ReLU follows them) ---
    g1 = jnp.ones((1, HIDDEN[0]), jnp.float32)
    bt1 = jnp.zeros((1, HIDDEN[0]), jnp.float32)
    g2 = jnp.ones((1, HIDDEN[1]), jnp.float32)
    bt2 = jnp.zeros((1, HIDDEN[1]), jnp.float32)

    # --- pack everything into one (SLAB_ROWS, 128) f32 slab ---
    tensors = dict(wqkv=wqkv, bqkv=bqkv, wo=wo, bo=bo,
                   w1=w1_f, b1=b1_f, g1=g1, bt1=bt1,
                   w2=w2, b2=b2, g2=g2, bt2=bt2,
                   wms=wms, bms=bms)
    slab = jnp.zeros((SLAB_ROWS, SLAB_LANES), jnp.float32)
    for name, val in tensors.items():
        off, rows, cols = _LAYOUT[name]
        slab = slab.at[off:off + rows, 0:cols].set(val.reshape(rows, cols))
    return slab


# ---------------- main --------------------------------------------------------
if __name__ == "__main__":
    key = jax.random.PRNGKey(0)
    k_params, k_x, k_eps = jax.random.split(key, 3)

    slab = init_params(k_params)                                   # (296, 128)
    x = jax.random.normal(k_x, (B, S, D), jnp.float32)             # layout: [B, S, D]
    eps = jax.random.normal(k_eps, (B, ACTION_DIM), jnp.float32)   # reparam noise

    mu, std, action = actor_forward(x, eps, slab)
    jax.block_until_ready((mu, std, action))

    assert mu.shape == (B, ACTION_DIM)
    assert std.shape == (B, ACTION_DIM)
    assert action.shape == (B, ACTION_DIM)
    assert bool(jnp.all(jnp.isfinite(mu)))
    assert bool(jnp.all(std > 0.0))
    assert bool(jnp.all(jnp.abs(action) <= 1.0))
    print("KERNEL_OK")
</pallas_src>

<mosaic_0001>
module attributes {stable_mosaic.version = 11 : i64} {
  func.func @actor_kernel(%arg0: memref<2x8x16xf32, #tpu.memory_space<vmem>>, %arg1: memref<296x128xf32, #tpu.memory_space<vmem>>, %arg2: memref<2x4xf32, #tpu.memory_space<vmem>>, %arg3: memref<2x12xf32, #tpu.memory_space<vmem>>) attributes {dimension_semantics = [], scalar_prefetch = 0 : i64, scratch_operands = 0 : i64, tpu.core_type = #tpu.core_type<tc>} {
    %c0 = arith.constant 0 : index
    %c0_0 = arith.constant 0 : index
    %c0_1 = arith.constant 0 : index
    %0 = vector.load %arg0[%c0, %c0_0, %c0_1] : memref<2x8x16xf32, #tpu.memory_space<vmem>>, vector<2x8x16xf32>
    %1 = vector.shape_cast %0 : vector<2x8x16xf32> to vector<16x16xf32>
    %c0_2 = arith.constant 0 : index
    %c0_3 = arith.constant 0 : index
    %2 = vector.load %arg1[%c0_2, %c0_3] : memref<296x128xf32, #tpu.memory_space<vmem>>, vector<16x48xf32>
    %cst = arith.constant dense<0.000000e+00> : vector<16x48xf32>
    %3 = tpu.matmul %1, %2, %cst {dimension_numbers = #tpu.dot_dimension_numbers<[1], [0], [0], [1], [0, 0, 1, 1], [], []>} : vector<16x16xf32>, vector<16x48xf32>, vector<16x48xf32> -> vector<16x48xf32>
    %c16 = arith.constant 16 : index
    %c0_4 = arith.constant 0 : index
    %4 = vector.load %arg1[%c16, %c0_4] : memref<296x128xf32, #tpu.memory_space<vmem>>, vector<1x48xf32>
    %5 = vector.broadcast %4 : vector<1x48xf32> to vector<16x48xf32>
    %6 = arith.addf %3, %5 : vector<16x48xf32>
    %7 = vector.extract_strided_slice %6 {offsets = [0, 0], sizes = [16, 16], strides = [1, 1]} : vector<16x48xf32> to vector<16x16xf32>
    %8 = vector.shape_cast %7 : vector<16x16xf32> to vector<2x8x16xf32>
    %9 = vector.extract_strided_slice %6 {offsets = [0, 16], sizes = [16, 16], strides = [1, 1]} : vector<16x48xf32> to vector<16x16xf32>
    %10 = vector.shape_cast %9 : vector<16x16xf32> to vector<2x8x16xf32>
    %11 = vector.extract_strided_slice %6 {offsets = [0, 32], sizes = [16, 16], strides = [1, 1]} : vector<16x48xf32> to vector<16x16xf32>
    %12 = vector.shape_cast %11 : vector<16x16xf32> to vector<2x8x16xf32>
    %cst_5 = arith.constant 0.000000e+00 : f32
    %13 = vector.broadcast %cst_5 : f32 to vector<16x16xf32>
    %14 = vector.extract_strided_slice %8 {offsets = [0, 0, 0], sizes = [2, 8, 8], strides = [1, 1, 1]} : vector<2x8x16xf32> to vector<2x8x8xf32>
    %15 = vector.extract_strided_slice %10 {offsets = [0, 0, 0], sizes = [2, 8, 8], strides = [1, 1, 1]} : vector<2x8x16xf32> to vector<2x8x8xf32>
    %16 = vector.extract_strided_slice %12 {offsets = [0, 0, 0], sizes = [2, 8, 8], strides = [1, 1, 1]} : vector<2x8x16xf32> to vector<2x8x8xf32>
    "tpu.trace_start"() <{level = 10 : i32, message = "bqd,bkd->bqk"}> : () -> ()
    %cst_6 = arith.constant dense<0.000000e+00> : vector<2x8x8xf32>
    %17 = tpu.matmul %14, %15, %cst_6 {dimension_numbers = #tpu.dot_dimension_numbers<[2], [2], [1], [1], [0, 0, 0, 1, 1, 1], [0], [0]>} : vector<2x8x8xf32>, vector<2x8x8xf32>, vector<2x8x8xf32> -> vector<2x8x8xf32>
    "tpu.trace_stop"() : () -> ()
    %cst_7 = arith.constant 0.353553385 : f32
    %18 = vector.broadcast %cst_7 : f32 to vector<2x8x8xf32>
    %19 = arith.mulf %17, %18 : vector<2x8x8xf32>
    %cst_8 = arith.constant dense<0xFF800000> : vector<2x8xf32>
    %20 = vector.multi_reduction <maximumf>, %19, %cst_8 [2] : vector<2x8x8xf32> to vector<2x8xf32>
    %21 = vector.shape_cast %20 : vector<2x8xf32> to vector<2x8x1xf32>
    %22 = vector.broadcast %21 : vector<2x8x1xf32> to vector<2x8x8xf32>
    %23 = arith.subf %19, %22 : vector<2x8x8xf32>
    %24 = math.exp %23 : vector<2x8x8xf32>
    %cst_9 = arith.constant dense<0.000000e+00> : vector<2x8xf32>
    %25 = vector.multi_reduction <add>, %24, %cst_9 [2] : vector<2x8x8xf32> to vector<2x8xf32>
    %26 = vector.shape_cast %25 : vector<2x8xf32> to vector<2x8x1xf32>
    %27 = vector.broadcast %26 : vector<2x8x1xf32> to vector<2x8x8xf32>
    %28 = arith.divf %24, %27 : vector<2x8x8xf32>
    "tpu.trace_start"() <{level = 10 : i32, message = "bqk,bkd->bqd"}> : () -> ()
    %cst_10 = arith.constant dense<0.000000e+00> : vector<2x8x8xf32>
    %29 = tpu.matmul %28, %16, %cst_10 {dimension_numbers = #tpu.dot_dimension_numbers<[2], [1], [1], [2], [0, 0, 0, 1, 1, 2], [0], [0]>} : vector<2x8x8xf32>, vector<2x8x8xf32>, vector<2x8x8xf32> -> vector<2x8x8xf32>
    "tpu.trace_stop"() : () -> ()
    %c24 = arith.constant 24 : index
    %c0_11 = arith.constant 0 : index
    %30 = vector.load %arg1[%c24, %c0_11] : memref<296x128xf32, #tpu.memory_space<vmem>>, vector<8x16xf32>
    %31 = vector.shape_cast %29 : vector<2x8x8xf32> to vector<16x8xf32>
    %cst_12 = arith.constant dense<0.000000e+00> : vector<16x16xf32>
    %32 = tpu.matmul %31, %30, %cst_12 {dimension_numbers = #tpu.dot_dimension_numbers<[1], [0], [0], [1], [0, 0, 1, 1], [], []>} : vector<16x8xf32>, vector<8x16xf32>, vector<16x16xf32> -> vector<16x16xf32>
    %33 = arith.addf %13, %32 : vector<16x16xf32>
    %34 = vector.extract_strided_slice %8 {offsets = [0, 0, 8], sizes = [2, 8, 8], strides = [1, 1, 1]} : vector<2x8x16xf32> to vector<2x8x8xf32>
    %35 = vector.extract_strided_slice %10 {offsets = [0, 0, 8], sizes = [2, 8, 8], strides = [1, 1, 1]} : vector<2x8x16xf32> to vector<2x8x8xf32>
    %36 = vector.extract_strided_slice %12 {offsets = [0, 0, 8], sizes = [2, 8, 8], strides = [1, 1, 1]} : vector<2x8x16xf32> to vector<2x8x8xf32>
    "tpu.trace_start"() <{level = 10 : i32, message = "bqd,bkd->bqk"}> : () -> ()
    %cst_13 = arith.constant dense<0.000000e+00> : vector<2x8x8xf32>
    %37 = tpu.matmul %34, %35, %cst_13 {dimension_numbers = #tpu.dot_dimension_numbers<[2], [2], [1], [1], [0, 0, 0, 1, 1, 1], [0], [0]>} : vector<2x8x8xf32>, vector<2x8x8xf32>, vector<2x8x8xf32> -> vector<2x8x8xf32>
    "tpu.trace_stop"() : () -> ()
    %cst_14 = arith.constant 0.353553385 : f32
    %38 = vector.broadcast %cst_14 : f32 to vector<2x8x8xf32>
    %39 = arith.mulf %37, %38 : vector<2x8x8xf32>
    %cst_15 = arith.constant dense<0xFF800000> : vector<2x8xf32>
    %40 = vector.multi_reduction <maximumf>, %39, %cst_15 [2] : vector<2x8x8xf32> to vector<2x8xf32>
    %41 = vector.shape_cast %40 : vector<2x8xf32> to vector<2x8x1xf32>
    %42 = vector.broadcast %41 : vector<2x8x1xf32> to vector<2x8x8xf32>
    %43 = arith.subf %39, %42 : vector<2x8x8xf32>
    %44 = math.exp %43 : vector<2x8x8xf32>
    %cst_16 = arith.constant dense<0.000000e+00> : vector<2x8xf32>
    %45 = vector.multi_reduction <add>, %44, %cst_16 [2] : vector<2x8x8xf32> to vector<2x8xf32>
    %46 = vector.shape_cast %45 : vector<2x8xf32> to vector<2x8x1xf32>
    %47 = vector.broadcast %46 : vector<2x8x1xf32> to vector<2x8x8xf32>
    %48 = arith.divf %44, %47 : vector<2x8x8xf32>
    "tpu.trace_start"() <{level = 10 : i32, message = "bqk,bkd->bqd"}> : () -> ()
    %cst_17 = arith.constant dense<0.000000e+00> : vector<2x8x8xf32>
    %49 = tpu.matmul %48, %36, %cst_17 {dimension_numbers = #tpu.dot_dimension_numbers<[2], [1], [1], [2], [0, 0, 0, 1, 1, 2], [0], [0]>} : vector<2x8x8xf32>, vector<2x8x8xf32>, vector<2x8x8xf32> -> vector<2x8x8xf32>
    "tpu.trace_stop"() : () -> ()
    %c32 = arith.constant 32 : index
    %c0_18 = arith.constant 0 : index
    %50 = vector.load %arg1[%c32, %c0_18] : memref<296x128xf32, #tpu.memory_space<vmem>>, vector<8x16xf32>
    %51 = vector.shape_cast %49 : vector<2x8x8xf32> to vector<16x8xf32>
    %cst_19 = arith.constant dense<0.000000e+00> : vector<16x16xf32>
    %52 = tpu.matmul %51, %50, %cst_19 {dimension_numbers = #tpu.dot_dimension_numbers<[1], [0], [0], [1], [0, 0, 1, 1], [], []>} : vector<16x8xf32>, vector<8x16xf32>, vector<16x16xf32> -> vector<16x16xf32>
    %53 = arith.addf %33, %52 : vector<16x16xf32>
    %c40 = arith.constant 40 : index
    %c0_20 = arith.constant 0 : index
    %54 = vector.load %arg1[%c40, %c0_20] : memref<296x128xf32, #tpu.memory_space<vmem>>, vector<1x16xf32>
    %55 = vector.broadcast %54 : vector<1x16xf32> to vector<16x16xf32>
    %56 = arith.addf %53, %55 : vector<16x16xf32>
    %57 = arith.addf %1, %56 : vector<16x16xf32>
    %cst_21 = arith.constant dense<0.000000e+00> : vector<16xf32>
    %58 = vector.multi_reduction <add>, %57, %cst_21 [1] : vector<16x16xf32> to vector<16xf32>
    %59 = vector.shape_cast %58 : vector<16xf32> to vector<16x1xf32>
    %cst_22 = arith.constant 1.600000e+01 : f32
    %60 = vector.broadcast %cst_22 : f32 to vector<16x1xf32>
    %61 = arith.divf %59, %60 : vector<16x1xf32>
    %62 = vector.broadcast %61 : vector<16x1xf32> to vector<16x16xf32>
    %63 = arith.subf %57, %62 : vector<16x16xf32>
    %64 = arith.mulf %63, %63 : vector<16x16xf32>
    %cst_23 = arith.constant dense<0.000000e+00> : vector<16xf32>
    %65 = vector.multi_reduction <add>, %64, %cst_23 [1] : vector<16x16xf32> to vector<16xf32>
    %66 = vector.shape_cast %65 : vector<16xf32> to vector<16x1xf32>
    %cst_24 = arith.constant 1.600000e+01 : f32
    %67 = vector.broadcast %cst_24 : f32 to vector<16x1xf32>
    %68 = arith.divf %66, %67 : vector<16x1xf32>
    %69 = vector.broadcast %61 : vector<16x1xf32> to vector<16x16xf32>
    %70 = arith.subf %57, %69 : vector<16x16xf32>
    %cst_25 = arith.constant 9.99999974E-6 : f32
    %71 = vector.broadcast %cst_25 : f32 to vector<16x1xf32>
    %72 = arith.addf %68, %71 : vector<16x1xf32>
    %73 = math.rsqrt %72 : vector<16x1xf32>
    %74 = vector.broadcast %73 : vector<16x1xf32> to vector<16x16xf32>
    %75 = arith.mulf %70, %74 : vector<16x16xf32>
    %76 = vector.shape_cast %75 : vector<16x16xf32> to vector<2x8x16xf32>
    %cst_26 = arith.constant 0.000000e+00 : f32
    %77 = vector.broadcast %cst_26 : f32 to vector<2x32xf32>
    %c48 = arith.constant 48 : index
    %c0_27 = arith.constant 0 : index
    %78 = vector.load %arg1[%c48, %c0_27] : memref<296x128xf32, #tpu.memory_space<vmem>>, vector<16x32xf32>
    %79 = vector.extract_strided_slice %76 {offsets = [0, 0, 0], sizes = [2, 1, 16], strides = [1, 1, 1]} : vector<2x8x16xf32> to vector<2x1x16xf32>
    %80 = vector.shape_cast %79 : vector<2x1x16xf32> to vector<2x16xf32>
    %cst_28 = arith.constant dense<0.000000e+00> : vector<2x32xf32>
    %81 = tpu.matmul %80, %78, %cst_28 {dimension_numbers = #tpu.dot_dimension_numbers<[1], [0], [0], [1], [0, 0, 1, 1], [], []>} : vector<2x16xf32>, vector<16x32xf32>, vector<2x32xf32> -> vector<2x32xf32>
    %82 = arith.addf %77, %81 : vector<2x32xf32>
    %c64 = arith.constant 64 : index
    %c0_29 = arith.constant 0 : index
    %83 = vector.load %arg1[%c64, %c0_29] : memref<296x128xf32, #tpu.memory_space<vmem>>, vector<16x32xf32>
    %84 = vector.extract_strided_slice %76 {offsets = [0, 1, 0], sizes = [2, 1, 16], strides = [1, 1, 1]} : vector<2x8x16xf32> to vector<2x1x16xf32>
    %85 = vector.shape_cast %84 : vector<2x1x16xf32> to vector<2x16xf32>
    %cst_30 = arith.constant dense<0.000000e+00> : vector<2x32xf32>
    %86 = tpu.matmul %85, %83, %cst_30 {dimension_numbers = #tpu.dot_dimension_numbers<[1], [0], [0], [1], [0, 0, 1, 1], [], []>} : vector<2x16xf32>, vector<16x32xf32>, vector<2x32xf32> -> vector<2x32xf32>
    %87 = arith.addf %82, %86 : vector<2x32xf32>
    %c80 = arith.constant 80 : index
    %c0_31 = arith.constant 0 : index
    %88 = vector.load %arg1[%c80, %c0_31] : memref<296x128xf32, #tpu.memory_space<vmem>>, vector<16x32xf32>
    %89 = vector.extract_strided_slice %76 {offsets = [0, 2, 0], sizes = [2, 1, 16], strides = [1, 1, 1]} : vector<2x8x16xf32> to vector<2x1x16xf32>
    %90 = vector.shape_cast %89 : vector<2x1x16xf32> to vector<2x16xf32>
    %cst_32 = arith.constant dense<0.000000e+00> : vector<2x32xf32>
    %91 = tpu.matmul %90, %88, %cst_32 {dimension_numbers = #tpu.dot_dimension_numbers<[1], [0], [0], [1], [0, 0, 1, 1], [], []>} : vector<2x16xf32>, vector<16x32xf32>, vector<2x32xf32> -> vector<2x32xf32>
    %92 = arith.addf %87, %91 : vector<2x32xf32>
    %c96 = arith.constant 96 : index
    %c0_33 = arith.constant 0 : index
    %93 = vector.load %arg1[%c96, %c0_33] : memref<296x128xf32, #tpu.memory_space<vmem>>, vector<16x32xf32>
    %94 = vector.extract_strided_slice %76 {offsets = [0, 3, 0], sizes = [2, 1, 16], strides = [1, 1, 1]} : vector<2x8x16xf32> to vector<2x1x16xf32>
    %95 = vector.shape_cast %94 : vector<2x1x16xf32> to vector<2x16xf32>
    %cst_34 = arith.constant dense<0.000000e+00> : vector<2x32xf32>
    %96 = tpu.matmul %95, %93, %cst_34 {dimension_numbers = #tpu.dot_dimension_numbers<[1], [0], [0], [1], [0, 0, 1, 1], [], []>} : vector<2x16xf32>, vector<16x32xf32>, vector<2x32xf32> -> vector<2x32xf32>
    %97 = arith.addf %92, %96 : vector<2x32xf32>
    %c112 = arith.constant 112 : index
    %c0_35 = arith.constant 0 : index
    %98 = vector.load %arg1[%c112, %c0_35] : memref<296x128xf32, #tpu.memory_space<vmem>>, vector<16x32xf32>
    %99 = vector.extract_strided_slice %76 {offsets = [0, 4, 0], sizes = [2, 1, 16], strides = [1, 1, 1]} : vector<2x8x16xf32> to vector<2x1x16xf32>
    %100 = vector.shape_cast %99 : vector<2x1x16xf32> to vector<2x16xf32>
    %cst_36 = arith.constant dense<0.000000e+00> : vector<2x32xf32>
    %101 = tpu.matmul %100, %98, %cst_36 {dimension_numbers = #tpu.dot_dimension_numbers<[1], [0], [0], [1], [0, 0, 1, 1], [], []>} : vector<2x16xf32>, vector<16x32xf32>, vector<2x32xf32> -> vector<2x32xf32>
    %102 = arith.addf %97, %101 : vector<2x32xf32>
    %c128 = arith.constant 128 : index
    %c0_37 = arith.constant 0 : index
    %103 = vector.load %arg1[%c128, %c0_37] : memref<296x128xf32, #tpu.memory_space<vmem>>, vector<16x32xf32>
    %104 = vector.extract_strided_slice %76 {offsets = [0, 5, 0], sizes = [2, 1, 16], strides = [1, 1, 1]} : vector<2x8x16xf32> to vector<2x1x16xf32>
    %105 = vector.shape_cast %104 : vector<2x1x16xf32> to vector<2x16xf32>
    %cst_38 = arith.constant dense<0.000000e+00> : vector<2x32xf32>
    %106 = tpu.matmul %105, %103, %cst_38 {dimension_numbers = #tpu.dot_dimension_numbers<[1], [0], [0], [1], [0, 0, 1, 1], [], []>} : vector<2x16xf32>, vector<16x32xf32>, vector<2x32xf32> -> vector<2x32xf32>
    %107 = arith.addf %102, %106 : vector<2x32xf32>
    %c144 = arith.constant 144 : index
    %c0_39 = arith.constant 0 : index
    %108 = vector.load %arg1[%c144, %c0_39] : memref<296x128xf32, #tpu.memory_space<vmem>>, vector<16x32xf32>
    %109 = vector.extract_strided_slice %76 {offsets = [0, 6, 0], sizes = [2, 1, 16], strides = [1, 1, 1]} : vector<2x8x16xf32> to vector<2x1x16xf32>
    %110 = vector.shape_cast %109 : vector<2x1x16xf32> to vector<2x16xf32>
    %cst_40 = arith.constant dense<0.000000e+00> : vector<2x32xf32>
    %111 = tpu.matmul %110, %108, %cst_40 {dimension_numbers = #tpu.dot_dimension_numbers<[1], [0], [0], [1], [0, 0, 1, 1], [], []>} : vector<2x16xf32>, vector<16x32xf32>, vector<2x32xf32> -> vector<2x32xf32>
    %112 = arith.addf %107, %111 : vector<2x32xf32>
    %c160 = arith.constant 160 : index
    %c0_41 = arith.constant 0 : index
    %113 = vector.load %arg1[%c160, %c0_41] : memref<296x128xf32, #tpu.memory_space<vmem>>, vector<16x32xf32>
    %114 = vector.extract_strided_slice %76 {offsets = [0, 7, 0], sizes = [2, 1, 16], strides = [1, 1, 1]} : vector<2x8x16xf32> to vector<2x1x16xf32>
    %115 = vector.shape_cast %114 : vector<2x1x16xf32> to vector<2x16xf32>
    %cst_42 = arith.constant dense<0.000000e+00> : vector<2x32xf32>
    %116 = tpu.matmul %115, %113, %cst_42 {dimension_numbers = #tpu.dot_dimension_numbers<[1], [0], [0], [1], [0, 0, 1, 1], [], []>} : vector<2x16xf32>, vector<16x32xf32>, vector<2x32xf32> -> vector<2x32xf32>
    %117 = arith.addf %112, %116 : vector<2x32xf32>
    %c176 = arith.constant 176 : index
    %c0_43 = arith.constant 0 : index
    %118 = vector.load %arg1[%c176, %c0_43] : memref<296x128xf32, #tpu.memory_space<vmem>>, vector<1x32xf32>
    %119 = vector.broadcast %118 : vector<1x32xf32> to vector<2x32xf32>
    %120 = arith.addf %117, %119 : vector<2x32xf32>
    %cst_44 = arith.constant dense<0.000000e+00> : vector<2xf32>
    %121 = vector.multi_reduction <add>, %120, %cst_44 [1] : vector<2x32xf32> to vector<2xf32>
    %122 = vector.shape_cast %121 : vector<2xf32> to vector<2x1xf32>
    %cst_45 = arith.constant 3.200000e+01 : f32
    %123 = vector.broadcast %cst_45 : f32 to vector<2x1xf32>
    %124 = arith.divf %122, %123 : vector<2x1xf32>
    %125 = vector.broadcast %124 : vector<2x1xf32> to vector<2x32xf32>
    %126 = arith.subf %120, %125 : vector<2x32xf32>
    %127 = arith.mulf %126, %126 : vector<2x32xf32>
    %cst_46 = arith.constant dense<0.000000e+00> : vector<2xf32>
    %128 = vector.multi_reduction <add>, %127, %cst_46 [1] : vector<2x32xf32> to vector<2xf32>
    %129 = vector.shape_cast %128 : vector<2xf32> to vector<2x1xf32>
    %cst_47 = arith.constant 3.200000e+01 : f32
    %130 = vector.broadcast %cst_47 : f32 to vector<2x1xf32>
    %131 = arith.divf %129, %130 : vector<2x1xf32>
    %132 = vector.broadcast %124 : vector<2x1xf32> to vector<2x32xf32>
    %133 = arith.subf %120, %132 : vector<2x32xf32>
    %cst_48 = arith.constant 9.99999974E-6 : f32
    %134 = vector.broadcast %cst_48 : f32 to vector<2x1xf32>
    %135 = arith.addf %131, %134 : vector<2x1xf32>
    %136 = math.rsqrt %135 : vector<2x1xf32>
    %137 = vector.broadcast %136 : vector<2x1xf32> to vector<2x32xf32>
    %138 = arith.mulf %133, %137 : vector<2x32xf32>
    %c184 = arith.constant 184 : index
    %c0_49 = arith.constant 0 : index
    %139 = vector.load %arg1[%c184, %c0_49] : memref<296x128xf32, #tpu.memory_space<vmem>>, vector<1x32xf32>
    %140 = vector.broadcast %139 : vector<1x32xf32> to vector<2x32xf32>
    %141 = arith.mulf %138, %140 : vector<2x32xf32>
    %c192 = arith.constant 192 : index
    %c0_50 = arith.constant 0 : index
    %142 = vector.load %arg1[%c192, %c0_50] : memref<296x128xf32, #tpu.memory_space<vmem>>, vector<1x32xf32>
    %143 = vector.broadcast %142 : vector<1x32xf32> to vector<2x32xf32>
    %144 = arith.addf %141, %143 : vector<2x32xf32>
    %cst_51 = arith.constant 0.000000e+00 : f32
    %145 = vector.broadcast %cst_51 : f32 to vector<2x32xf32>
    %146 = arith.maximumf %144, %145 : vector<2x32xf32>
    %c200 = arith.constant 200 : index
    %c0_52 = arith.constant 0 : index
    %147 = vector.load %arg1[%c200, %c0_52] : memref<296x128xf32, #tpu.memory_space<vmem>>, vector<32x32xf32>
    %cst_53 = arith.constant dense<0.000000e+00> : vector<2x32xf32>
    %148 = tpu.matmul %146, %147, %cst_53 {dimension_numbers = #tpu.dot_dimension_numbers<[1], [0], [0], [1], [0, 0, 1, 1], [], []>} : vector<2x32xf32>, vector<32x32xf32>, vector<2x32xf32> -> vector<2x32xf32>
    %c232 = arith.constant 232 : index
    %c0_54 = arith.constant 0 : index
    %149 = vector.load %arg1[%c232, %c0_54] : memref<296x128xf32, #tpu.memory_space<vmem>>, vector<1x32xf32>
    %150 = vector.broadcast %149 : vector<1x32xf32> to vector<2x32xf32>
    %151 = arith.addf %148, %150 : vector<2x32xf32>
    %cst_55 = arith.constant dense<0.000000e+00> : vector<2xf32>
    %152 = vector.multi_reduction <add>, %151, %cst_55 [1] : vector<2x32xf32> to vector<2xf32>
    %153 = vector.shape_cast %152 : vector<2xf32> to vector<2x1xf32>
    %cst_56 = arith.constant 3.200000e+01 : f32
    %154 = vector.broadcast %cst_56 : f32 to vector<2x1xf32>
    %155 = arith.divf %153, %154 : vector<2x1xf32>
    %156 = vector.broadcast %155 : vector<2x1xf32> to vector<2x32xf32>
    %157 = arith.subf %151, %156 : vector<2x32xf32>
    %158 = arith.mulf %157, %157 : vector<2x32xf32>
    %cst_57 = arith.constant dense<0.000000e+00> : vector<2xf32>
    %159 = vector.multi_reduction <add>, %158, %cst_57 [1] : vector<2x32xf32> to vector<2xf32>
    %160 = vector.shape_cast %159 : vector<2xf32> to vector<2x1xf32>
    %cst_58 = arith.constant 3.200000e+01 : f32
    %161 = vector.broadcast %cst_58 : f32 to vector<2x1xf32>
    %162 = arith.divf %160, %161 : vector<2x1xf32>
    %163 = vector.broadcast %155 : vector<2x1xf32> to vector<2x32xf32>
    %164 = arith.subf %151, %163 : vector<2x32xf32>
    %cst_59 = arith.constant 9.99999974E-6 : f32
    %165 = vector.broadcast %cst_59 : f32 to vector<2x1xf32>
    %166 = arith.addf %162, %165 : vector<2x1xf32>
    %167 = math.rsqrt %166 : vector<2x1xf32>
    %168 = vector.broadcast %167 : vector<2x1xf32> to vector<2x32xf32>
    %169 = arith.mulf %164, %168 : vector<2x32xf32>
    %c240 = arith.constant 240 : index
    %c0_60 = arith.constant 0 : index
    %170 = vector.load %arg1[%c240, %c0_60] : memref<296x128xf32, #tpu.memory_space<vmem>>, vector<1x32xf32>
    %171 = vector.broadcast %170 : vector<1x32xf32> to vector<2x32xf32>
    %172 = arith.mulf %169, %171 : vector<2x32xf32>
    %c248 = arith.constant 248 : index
    %c0_61 = arith.constant 0 : index
    %173 = vector.load %arg1[%c248, %c0_61] : memref<296x128xf32, #tpu.memory_space<vmem>>, vector<1x32xf32>
    %174 = vector.broadcast %173 : vector<1x32xf32> to vector<2x32xf32>
    %175 = arith.addf %172, %174 : vector<2x32xf32>
    %cst_62 = arith.constant 0.000000e+00 : f32
    %176 = vector.broadcast %cst_62 : f32 to vector<2x32xf32>
    %177 = arith.maximumf %175, %176 : vector<2x32xf32>
    %c256 = arith.constant 256 : index
    %c0_63 = arith.constant 0 : index
    %178 = vector.load %arg1[%c256, %c0_63] : memref<296x128xf32, #tpu.memory_space<vmem>>, vector<32x8xf32>
    %cst_64 = arith.constant dense<0.000000e+00> : vector<2x8xf32>
    %179 = tpu.matmul %177, %178, %cst_64 {dimension_numbers = #tpu.dot_dimension_numbers<[1], [0], [0], [1], [0, 0, 1, 1], [], []>} : vector<2x32xf32>, vector<32x8xf32>, vector<2x8xf32> -> vector<2x8xf32>
    %c288 = arith.constant 288 : index
    %c0_65 = arith.constant 0 : index
    %180 = vector.load %arg1[%c288, %c0_65] : memref<296x128xf32, #tpu.memory_space<vmem>>, vector<1x8xf32>
    %181 = vector.broadcast %180 : vector<1x8xf32> to vector<2x8xf32>
    %182 = arith.addf %179, %181 : vector<2x8xf32>
    %183 = vector.extract_strided_slice %182 {offsets = [0, 0], sizes = [2, 4], strides = [1, 1]} : vector<2x8xf32> to vector<2x4xf32>
    %184 = vector.extract_strided_slice %182 {offsets = [0, 4], sizes = [2, 4], strides = [1, 1]} : vector<2x8xf32> to vector<2x4xf32>
    %cst_66 = arith.constant 5.000000e-01 : f32
    %185 = vector.broadcast %cst_66 : f32 to vector<2x4xf32>
    %186 = arith.mulf %185, %184 : vector<2x4xf32>
    %187 = math.exp %186 : vector<2x4xf32>
    %c0_67 = arith.constant 0 : index
    %c0_68 = arith.constant 0 : index
    %188 = vector.load %arg2[%c0_67, %c0_68] : memref<2x4xf32, #tpu.memory_space<vmem>>, vector<2x4xf32>
    %189 = arith.mulf %188, %187 : vector<2x4xf32>
    %190 = arith.addf %183, %189 : vector<2x4xf32>
    %191 = math.tanh %190 : vector<2x4xf32>
    %192 = tpu.concatenate %183, %187, %191 in 1 : vector<2x4xf32>, vector<2x4xf32>, vector<2x4xf32> -> vector<2x12xf32>
    %c0_69 = arith.constant 0 : index
    %c0_70 = arith.constant 0 : index
    %193 = vector.load %arg3[%c0_69, %c0_70] : memref<2x12xf32, #tpu.memory_space<vmem>>, vector<2x12xf32>
    tpu.vector_store %arg3[%c0_69, %c0_70], %192 {strides = array<i32>} : memref<2x12xf32, #tpu.memory_space<vmem>>, vector<2x12xf32>,
    return
  }
}

</mosaic_0001>

<llo_original>
// kernel: actor_forward.1
$region0: #{actor_forward.1}
  #allocation0 [shape = 'u32[]', space=smem, size = 0x4, offset = 0x4, fixed_abs, tag = 'smem constant byte address 0x4 - core index']
  #allocation1 [shape = 'u32[144,128]{1,0:T(1,128)}', space=vmem, size = 0x12000, scoped, tag = 'internal scratch']
  %s0 = inlined_call_operand.hbm [shape: f32[2,8,16], index: 0, kind: input, shape index: {}]
  %s1 = inlined_call_operand.hbm [shape: f32[296,128], index: 1, kind: input, shape index: {}]
  %s2 = inlined_call_operand.hbm [shape: f32[2,4], index: 2, kind: input, shape index: {}]
  %s3 = inlined_call_operand.vmem [shape: f32[2,12], index: 3, kind: output, shape index: {}]
  %s4 = sld [smem:[#allocation0]]
  $region34: #{actor_forward.1} parent=0
    _
  %s6 = ssub.s32 1, %s4
  %s7 = scalar_select 0, %s6, %s4
  $region1: #{actor_forward.1} parent=0
    #allocation2 [shape = 'u8[8192]{0}', space=vmem, size = 0x2000, scoped, tag = 'input window, operand 0, single buffered']
    #allocation3 [shape = 's32[1]{0}', space=sflag, size = 0x4, scoped, tag = 'scoped memory for actor_forward.1']
    #allocation4 [shape = 'u8[151552]{0}', space=vmem, size = 0x25000, scoped, tag = 'input window, operand 1, single buffered']
    #allocation5 [shape = 's32[1]{0}', space=sflag, size = 0x4, scoped, tag = 'scoped memory for actor_forward.1']
    #allocation6 [shape = 'u8[1024]{0}', space=vmem, size = 0x400, scoped, tag = 'input window, operand 2, single buffered']
    %8 = vsyncpa [#allocation3], 0
    %9 = vsyncpa [#allocation5], 0
    // Predicated region
    $region2: #{actor_forward.1} parent=1 // pred_check
      _
    $region3: #{actor_forward.1} parent=1 // pred_check_branch
      %11 = sbr.rel (0) target = $region5
    $region4: #{actor_forward.1} parent=1 // pred_region
      %s13 = ssub.s32 256, 256
      %14 = vsyncadd [#allocation3], %s13
      %s15 = sshll.u32 [#allocation2], 4
      %s16 = int_to_ptr.vmem [resolvable:$true] %s15
      %21 = dma.hbm_to_vmem [thread:$0]  %s0, 256, %s16, [#allocation3], 128, 128, 8
    $region5: #{actor_forward.1} parent=1 // pred_fallthru
      _
    // Predicated region
    $region6: #{actor_forward.1} parent=1 // pred_check
      _
    $region7: #{actor_forward.1} parent=1 // pred_check_branch
      %23 = sbr.rel (0) target = $region9
    $region8: #{actor_forward.1} parent=1 // pred_region
      %s25 = ssub.s32 4736, 4736
      %26 = vsyncadd [#allocation5], %s25
      %s27 = sshll.u32 [#allocation4], 4
      %s28 = int_to_ptr.vmem [resolvable:$true] %s27
      %33 = dma.hbm_to_vmem [thread:$0]  %s1, 4736, %s28, [#allocation5], 128, 128, 8
    $region9: #{actor_forward.1} parent=1 // pred_fallthru
      _
    // Predicated region
    $region10: #{actor_forward.1} parent=1 // pred_check
      _
    $region11: #{actor_forward.1} parent=1 // pred_check_branch
      %35 = sbr.rel (0) target = $region13
    $region12: #{actor_forward.1} parent=1 // pred_region
      %s37 = ssub.s32 32, 32
      %38 = vsyncadd [#allocation5], %s37
      %s40 = sshll.u32 [#allocation6], 4
      %s41 = int_to_ptr.vmem [resolvable:$true] %s40
      %43 = dma.hbm_to_vmem [thread:$0]  %s2, 32, %s41, [#allocation5]
    $region13: #{actor_forward.1} parent=1 // pred_fallthru
      _
    // Predicated region
    $region14: #{actor_forward.1} parent=1 // pred_check
      _
    $region15: #{actor_forward.1} parent=1 // pred_check_branch
      %45 = sbr.rel (0) target = $region17
    $region16: #{actor_forward.1} parent=1 // pred_region
      %46 = dma.done [#allocation3], 256
    $region17: #{actor_forward.1} parent=1 // pred_fallthru
      _
    // Predicated region
    $region18: #{actor_forward.1} parent=1 // pred_check
      _
    $region19: #{actor_forward.1} parent=1 // pred_check_branch
      %48 = sbr.rel (0) target = $region21
    $region20: #{actor_forward.1} parent=1 // pred_region
      %49 = dma.done [#allocation5], 4736
    $region21: #{actor_forward.1} parent=1 // pred_fallthru
      _
    // Predicated region
    $region22: #{actor_forward.1} parent=1 // pred_check
      _
    $region23: #{actor_forward.1} parent=1 // pred_check_branch
      %51 = sbr.rel (0) target = $region25
    $region24: #{actor_forward.1} parent=1 // pred_region
      %52 = dma.done [#allocation5], 32
    $region25: #{actor_forward.1} parent=1 // pred_fallthru
      _
    %v53 = vld [vmem:[#allocation2] sm:$0xff]
    %v54 = vld [vmem:[#allocation2 + $0x8] sm:$0xff]
    %v55 = vld [vmem:[#allocation4] sm:$0xff]
    %v56 = vld [vmem:[#allocation4 + $0x8] sm:$0xff]
    %v57 = vld [vmem:[#allocation4 + $0x10] sm:$0x1]
    %v58 = vlaneseq
    %v59 = vshrl.u32 %v58, 7
    %v60 = vsub.s32 0, %v59
    %v61 = vrot.slane %v57, %v60
    %vm62 = vcmask 130048
    %v64 = vsel %vm62, %v53, 0
    %v67 = vsel %vm62, %v54, 0
    %69 = vmatprep.subr.mxu0 0.0
    %70 = vmatpush1.msra.mxu0 0.0
    %71 = vmatprep.subr.mxu0 0.0
    %72 = vmatpush1.msra.mxu0 0.0
    %73 = vmatprep.subr.mxu0 0.0
    %74 = vmatpush1.msra.mxu0 0.0
    %75 = vmatprep.subr.mxu0 0.0
    %76 = vmatpush1.msra.mxu0 0.0
    %77 = vmatprep.subr.mxu0 0.0
    %78 = vmatpush1.msra.mxu0 0.0
    %79 = vmatprep.subr.mxu0 0.0
    %80 = vmatpush1.msra.mxu0 0.0
    %81 = vmatprep.subr.mxu0 0.0
    %82 = vmatpush1.msra.mxu0 0.0
    %83 = vmatprep.subr.mxu0 0.0
    %84 = vmatpush1.msra.mxu0 0.0
    %85 = vmatprep.subr.mxu0 0.0
    %86 = vmatpush1.msra.mxu0 0.0
    %87 = vmatprep.subr.mxu0 0.0
    %88 = vmatpush1.msra.mxu0 0.0
    %89 = vmatprep.subr.mxu0 0.0
    %90 = vmatpush1.msra.mxu0 0.0
    %91 = vmatprep.subr.mxu0 0.0
    %92 = vmatpush1.msra.mxu0 0.0
    %93 = vmatprep.subr.mxu0 0.0
    %94 = vmatpush1.msra.mxu0 0.0
    %95 = vmatprep.subr.mxu0 0.0
    %96 = vmatpush1.msra.mxu0 0.0
    %97 = vmatprep.subr.mxu0 0.0
    %98 = vmatpush1.msra.mxu0 %v56
    %99 = vmatprep.subr.mxu0 0.0
    %100 = vmatpush1.msra.mxu0 %v55
    %101 = vmatprep.subr.mxu0 0.0
    %102 = vmatpush2.msra.mxu0 0.0
    %103 = vmatprep.subr.mxu0 0.0
    %104 = vmatpush2.msra.mxu0 0.0
    %105 = vmatprep.subr.mxu0 0.0
    %106 = vmatpush2.msra.mxu0 0.0
    %107 = vmatprep.subr.mxu0 0.0
    %108 = vmatpush2.msra.mxu0 0.0
    %109 = vmatprep.subr.mxu0 0.0
    %110 = vmatpush2.msra.mxu0 0.0
    %111 = vmatprep.subr.mxu0 0.0
    %112 = vmatpush2.msra.mxu0 0.0
    %113 = vmatprep.subr.mxu0 0.0
    %114 = vmatpush2.msra.mxu0 0.0
    %115 = vmatprep.subr.mxu0 0.0
    %116 = vmatpush2.msra.mxu0 0.0
    %117 = vmatprep.subr.mxu0 0.0
    %118 = vmatpush2.msra.mxu0 0.0
    %119 = vmatprep.subr.mxu0 0.0
    %120 = vmatpush2.msra.mxu0 0.0
    %121 = vmatprep.subr.mxu0 0.0
    %122 = vmatpush2.msra.mxu0 0.0
    %123 = vmatprep.subr.mxu0 0.0
    %124 = vmatpush2.msra.mxu0 0.0
    %125 = vmatprep.subr.mxu0 0.0
    %126 = vmatpush2.msra.mxu0 0.0
    %127 = vmatprep.subr.mxu0 0.0
    %128 = vmatpush2.msra.mxu0 0.0
    %129 = vmatprep.subr.mxu0 0.0
    %130 = vmatpush2.msra.mxu0 0.0
    %131 = vmatprep.subr.mxu0 0.0
    %132 = vmatpush2.msra.mxu0 0.0
    %133 = vmatprep.mubr.f32.mxu0 0.0
    %134 = vmatmul.mubr.f32.gmra.mxu0 %v64
    %v135 = vpop.f32.mrf.mxu0
    %v136 = vadd.f32 %v61, %v135
    %v137 = vpop.f32.mrf.mxu0
    %138 = vmatprep.mubr.f32.mxu0 0.0
    %139 = vmatmul.mubr.f32.gmra.mxu0 %v67
    %v140 = vpop.f32.mrf.mxu0
    %v141 = vadd.f32 %v61, %v140
    %v142 = vpop.f32.mrf.mxu0
    %143 = vdwg.mxu0
    %145 = vrot.lane.b32.xlu0 %v136, 112
    %v146 = vpop.permute.xlu0 %145
    %vm147 = vcmask 64512
    %v148 = vsel %vm147, %v136, 0
    %v150 = vsel %vm147, %v146, 0
    %152 = vmatprep.subr.mxu0 0.0
    %153 = vmatpush1.xpose.msra.mxu0 0.0
    %154 = vmatprep.subr.mxu0 0.0
    %155 = vmatpush1.xpose.msra.mxu0 0.0
    %156 = vmatprep.subr.mxu0 0.0
    %157 = vmatpush1.xpose.msra.mxu0 0.0
    %158 = vmatprep.subr.mxu0 0.0
    %159 = vmatpush1.xpose.msra.mxu0 0.0
    %160 = vmatprep.subr.mxu0 0.0
    %161 = vmatpush1.xpose.msra.mxu0 0.0
    %162 = vmatprep.subr.mxu0 0.0
    %163 = vmatpush1.xpose.msra.mxu0 0.0
    %164 = vmatprep.subr.mxu0 0.0
    %165 = vmatpush1.xpose.msra.mxu0 0.0
    %166 = vmatprep.subr.mxu0 0.0
    %167 = vmatpush1.xpose.msra.mxu0 0.0
    %168 = vmatprep.subr.mxu0 0.0
    %169 = vmatpush1.xpose.msra.mxu0 0.0
    %170 = vmatprep.subr.mxu0 0.0
    %171 = vmatpush1.xpose.msra.mxu0 0.0
    %172 = vmatprep.subr.mxu0 0.0
    %173 = vmatpush1.xpose.msra.mxu0 0.0
    %174 = vmatprep.subr.mxu0 0.0
    %175 = vmatpush1.xpose.msra.mxu0 0.0
    %176 = vmatprep.subr.mxu0 0.0
    %177 = vmatpush1.xpose.msra.mxu0 0.0
    %178 = vmatprep.subr.mxu0 0.0
    %179 = vmatpush1.xpose.msra.mxu0 0.0
    %180 = vmatprep.subr.mxu0 0.0
    %181 = vmatpush1.xpose.msra.mxu0 0.0
    %182 = vmatprep.subr.mxu0 0.0
    %183 = vmatpush1.xpose.msra.mxu0 %v150
    %184 = vmatprep.subr.mxu0 0.0
    %185 = vmatpush2.xpose.msra.mxu0 0.0
    %186 = vmatprep.subr.mxu0 0.0
    %187 = vmatpush2.xpose.msra.mxu0 0.0
    %188 = vmatprep.subr.mxu0 0.0
    %189 = vmatpush2.xpose.msra.mxu0 0.0
    %190 = vmatprep.subr.mxu0 0.0
    %191 = vmatpush2.xpose.msra.mxu0 0.0
    %192 = vmatprep.subr.mxu0 0.0
    %193 = vmatpush2.xpose.msra.mxu0 0.0
    %194 = vmatprep.subr.mxu0 0.0
    %195 = vmatpush2.xpose.msra.mxu0 0.0
    %196 = vmatprep.subr.mxu0 0.0
    %197 = vmatpush2.xpose.msra.mxu0 0.0
    %198 = vmatprep.subr.mxu0 0.0
    %199 = vmatpush2.xpose.msra.mxu0 0.0
    %200 = vmatprep.subr.mxu0 0.0
    %201 = vmatpush2.xpose.msra.mxu0 0.0
    %202 = vmatprep.subr.mxu0 0.0
    %203 = vmatpush2.xpose.msra.mxu0 0.0
    %204 = vmatprep.subr.mxu0 0.0
    %205 = vmatpush2.xpose.msra.mxu0 0.0
    %206 = vmatprep.subr.mxu0 0.0
    %207 = vmatpush2.xpose.msra.mxu0 0.0
    %208 = vmatprep.subr.mxu0 0.0
    %209 = vmatpush2.xpose.msra.mxu0 0.0
    %210 = vmatprep.subr.mxu0 0.0
    %211 = vmatpush2.xpose.msra.mxu0 0.0
    %212 = vmatprep.subr.mxu0 0.0
    %213 = vmatpush2.xpose.msra.mxu0 0.0
    %214 = vmatprep.subr.mxu0 0.0
    %215 = vmatpush2.xpose.msra.mxu0 0.0
    %216 = vmatprep.mubr.f32.mxu0 0.0
    %217 = vmatmul.mubr.f32.gmra.mxu0 %v148
    %v218 = vpop.f32.mrf.mxu0
    %v219 = vadd.f32 0.0, %v218
    %v220 = vpop.f32.mrf.mxu0
    %221 = vdwg.mxu0
    %223 = vrot.lane.b32.xlu0 %v141, 112
    %v224 = vpop.permute.xlu0 %223
    %v225 = vsel %vm147, %v141, 0
    %v227 = vsel %vm147, %v224, 0
    %229 = vmatprep.subr.mxu0 0.0
    %230 = vmatpush1.xpose.msra.mxu0 0.0
    %231 = vmatprep.subr.mxu0 0.0
    %232 = vmatpush1.xpose.msra.mxu0 0.0
    %233 = vmatprep.subr.mxu0 0.0
    %234 = vmatpush1.xpose.msra.mxu0 0.0
    %235 = vmatprep.subr.mxu0 0.0
    %236 = vmatpush1.xpose.msra.mxu0 0.0
    %237 = vmatprep.subr.mxu0 0.0
    %238 = vmatpush1.xpose.msra.mxu0 0.0
    %239 = vmatprep.subr.mxu0 0.0
    %240 = vmatpush1.xpose.msra.mxu0 0.0
    %241 = vmatprep.subr.mxu0 0.0
    %242 = vmatpush1.xpose.msra.mxu0 0.0
    %243 = vmatprep.subr.mxu0 0.0
    %244 = vmatpush1.xpose.msra.mxu0 0.0
    %245 = vmatprep.subr.mxu0 0.0
    %246 = vmatpush1.xpose.msra.mxu0 0.0
    %247 = vmatprep.subr.mxu0 0.0
    %248 = vmatpush1.xpose.msra.mxu0 0.0
    %249 = vmatprep.subr.mxu0 0.0
    %250 = vmatpush1.xpose.msra.mxu0 0.0
    %251 = vmatprep.subr.mxu0 0.0
    %252 = vmatpush1.xpose.msra.mxu0 0.0
    %253 = vmatprep.subr.mxu0 0.0
    %254 = vmatpush1.xpose.msra.mxu0 0.0
    %255 = vmatprep.subr.mxu0 0.0
    %256 = vmatpush1.xpose.msra.mxu0 0.0
    %257 = vmatprep.subr.mxu0 0.0
    %258 = vmatpush1.xpose.msra.mxu0 0.0
    %259 = vmatprep.subr.mxu0 0.0
    %260 = vmatpush1.xpose.msra.mxu0 %v227
    %261 = vmatprep.subr.mxu0 0.0
    %262 = vmatpush2.xpose.msra.mxu0 0.0
    %263 = vmatprep.subr.mxu0 0.0
    %264 = vmatpush2.xpose.msra.mxu0 0.0
    %265 = vmatprep.subr.mxu0 0.0
    %266 = vmatpush2.xpose.msra.mxu0 0.0
    %267 = vmatprep.subr.mxu0 0.0
    %268 = vmatpush2.xpose.msra.mxu0 0.0
    %269 = vmatprep.subr.mxu0 0.0
    %270 = vmatpush2.xpose.msra.mxu0 0.0
    %271 = vmatprep.subr.mxu0 0.0
    %272 = vmatpush2.xpose.msra.mxu0 0.0
    %273 = vmatprep.subr.mxu0 0.0
    %274 = vmatpush2.xpose.msra.mxu0 0.0
    %275 = vmatprep.subr.mxu0 0.0
    %276 = vmatpush2.xpose.msra.mxu0 0.0
    %277 = vmatprep.subr.mxu0 0.0
    %278 = vmatpush2.xpose.msra.mxu0 0.0
    %279 = vmatprep.subr.mxu0 0.0
    %280 = vmatpush2.xpose.msra.mxu0 0.0
    %281 = vmatprep.subr.mxu0 0.0
    %282 = vmatpush2.xpose.msra.mxu0 0.0
    %283 = vmatprep.subr.mxu0 0.0
    %284 = vmatpush2.xpose.msra.mxu0 0.0
    %285 = vmatprep.subr.mxu0 0.0
    %286 = vmatpush2.xpose.msra.mxu0 0.0
    %287 = vmatprep.subr.mxu0 0.0
    %288 = vmatpush2.xpose.msra.mxu0 0.0
    %289 = vmatprep.subr.mxu0 0.0
    %290 = vmatpush2.xpose.msra.mxu0 0.0
    %291 = vmatprep.subr.mxu0 0.0
    %292 = vmatpush2.xpose.msra.mxu0 0.0
    %293 = vmatprep.mubr.f32.mxu0 0.0
    %294 = vmatmul.mubr.f32.gmra.mxu0 %v225
    %v295 = vpop.f32.mrf.mxu0
    %v296 = vadd.f32 0.0, %v295
    %v297 = vpop.f32.mrf.mxu0
    %298 = vdwg.mxu0
    %v299 = vmul.f32 %v219, 0.35355338
    %v300 = vmul.f32 %v296, 0.35355338
    %v301 = vsel %vm147, %v299, -inf
    %302 = vmax.xlane.f32.xlu0 %v301
    %v303 = vpop.xlane.xlu0 %302
    %v304 = vsel %vm147, %v300, -inf
    %305 = vmax.xlane.f32.xlu0 %v304
    %v306 = vpop.xlane.xlu0 %305
    %v307 = vsub.f32 %v299, %v303
    %v308 = vsub.f32 %v300, %v306
    %v309 = vmul.f32 %v307, 1.442695
    %v310 = vpow.pop %v309
    %v311 = vmul.f32 %v308, 1.442695
    %v312 = vpow.pop %v311
    %v313 = vsel %vm147, %v310, 0.0
    %314 = vadd.xlane.f32.xlu0 %v313
    %v315 = vpop.xlane.xlu0 %314
    %v316 = vsel %vm147, %v312, 0.0
    %317 = vadd.xlane.f32.xlu0 %v316
    %v318 = vpop.xlane.xlu0 %317
    %v319 = vrcp.pop %v315
    %v320 = vmul.f32 %v310, %v319
    %v321 = vrcp.pop %v318
    %v322 = vmul.f32 %v312, %v321
    %323 = vrot.lane.b32.xlu0 %v136, 96
    %v324 = vpop.permute.xlu0 %323
    %v327 = vsel %vm147, %v320, 0
    %329 = vmatprep.subr.mxu0 0.0
    %330 = vmatpush1.msra.mxu0 0.0
    %331 = vmatprep.subr.mxu0 0.0
    %332 = vmatpush1.msra.mxu0 0.0
    %333 = vmatprep.subr.mxu0 0.0
    %334 = vmatpush1.msra.mxu0 0.0
    %335 = vmatprep.subr.mxu0 0.0
    %336 = vmatpush1.msra.mxu0 0.0
    %337 = vmatprep.subr.mxu0 0.0
    %338 = vmatpush1.msra.mxu0 0.0
    %339 = vmatprep.subr.mxu0 0.0
    %340 = vmatpush1.msra.mxu0 0.0
    %341 = vmatprep.subr.mxu0 0.0
    %342 = vmatpush1.msra.mxu0 0.0
    %343 = vmatprep.subr.mxu0 0.0
    %344 = vmatpush1.msra.mxu0 0.0
    %345 = vmatprep.subr.mxu0 0.0
    %346 = vmatpush1.msra.mxu0 0.0
    %347 = vmatprep.subr.mxu0 0.0
    %348 = vmatpush1.msra.mxu0 0.0
    %349 = vmatprep.subr.mxu0 0.0
    %350 = vmatpush1.msra.mxu0 0.0
    %351 = vmatprep.subr.mxu0 0.0
    %352 = vmatpush1.msra.mxu0 0.0
    %353 = vmatprep.subr.mxu0 0.0
    %354 = vmatpush1.msra.mxu0 0.0
    %355 = vmatprep.subr.mxu0 0.0
    %356 = vmatpush1.msra.mxu0 0.0
    %357 = vmatprep.subr.mxu0 0.0
    %358 = vmatpush1.msra.mxu0 0.0
    %359 = vmatprep.subr.mxu0 0.0
    %360 = vmatpush1.msra.mxu0 %v324
    %361 = vmatprep.subr.mxu0 0.0
    %362 = vmatpush2.msra.mxu0 0.0
    %363 = vmatprep.subr.mxu0 0.0
    %364 = vmatpush2.msra.mxu0 0.0
    %365 = vmatprep.subr.mxu0 0.0
    %366 = vmatpush2.msra.mxu0 0.0
    %367 = vmatprep.subr.mxu0 0.0
    %368 = vmatpush2.msra.mxu0 0.0
    %369 = vmatprep.subr.mxu0 0.0
    %370 = vmatpush2.msra.mxu0 0.0
    %371 = vmatprep.subr.mxu0 0.0
    %372 = vmatpush2.msra.mxu0 0.0
    %373 = vmatprep.subr.mxu0 0.0
    %374 = vmatpush2.msra.mxu0 0.0
    %375 = vmatprep.subr.mxu0 0.0
    %376 = vmatpush2.msra.mxu0 0.0
    %377 = vmatprep.subr.mxu0 0.0
    %378 = vmatpush2.msra.mxu0 0.0
    %379 = vmatprep.subr.mxu0 0.0
    %380 = vmatpush2.msra.mxu0 0.0
    %381 = vmatprep.subr.mxu0 0.0
    %382 = vmatpush2.msra.mxu0 0.0
    %383 = vmatprep.subr.mxu0 0.0
    %384 = vmatpush2.msra.mxu0 0.0
    %385 = vmatprep.subr.mxu0 0.0
    %386 = vmatpush2.msra.mxu0 0.0
    %387 = vmatprep.subr.mxu0 0.0
    %388 = vmatpush2.msra.mxu0 0.0
    %389 = vmatprep.subr.mxu0 0.0
    %390 = vmatpush2.msra.mxu0 0.0
    %391 = vmatprep.subr.mxu0 0.0
    %392 = vmatpush2.msra.mxu0 0.0
    %393 = vmatprep.mubr.f32.mxu0 0.0
    %394 = vmatmul.mubr.f32.gmra.mxu0 %v327
    %v395 = vpop.f32.mrf.mxu0
    %v396 = vadd.f32 0.0, %v395
    %v397 = vpop.f32.mrf.mxu0
    %398 = vdwg.mxu0
    %399 = vrot.lane.b32.xlu0 %v141, 96
    %v400 = vpop.permute.xlu0 %399
    %v403 = vsel %vm147, %v322, 0
    %405 = vmatprep.subr.mxu0 0.0
    %406 = vmatpush1.msra.mxu0 0.0
    %407 = vmatprep.subr.mxu0 0.0
    %408 = vmatpush1.msra.mxu0 0.0
    %409 = vmatprep.subr.mxu0 0.0
    %410 = vmatpush1.msra.mxu0 0.0
    %411 = vmatprep.subr.mxu0 0.0
    %412 = vmatpush1.msra.mxu0 0.0
    %413 = vmatprep.subr.mxu0 0.0
    %414 = vmatpush1.msra.mxu0 0.0
    %415 = vmatprep.subr.mxu0 0.0
    %416 = vmatpush1.msra.mxu0 0.0
    %417 = vmatprep.subr.mxu0 0.0
    %418 = vmatpush1.msra.mxu0 0.0
    %419 = vmatprep.subr.mxu0 0.0
    %420 = vmatpush1.msra.mxu0 0.0
    %421 = vmatprep.subr.mxu0 0.0
    %422 = vmatpush1.msra.mxu0 0.0
    %423 = vmatprep.subr.mxu0 0.0
    %424 = vmatpush1.msra.mxu0 0.0
    %425 = vmatprep.subr.mxu0 0.0
    %426 = vmatpush1.msra.mxu0 0.0
    %427 = vmatprep.subr.mxu0 0.0
    %428 = vmatpush1.msra.mxu0 0.0
    %429 = vmatprep.subr.mxu0 0.0
    %430 = vmatpush1.msra.mxu0 0.0
    %431 = vmatprep.subr.mxu0 0.0
    %432 = vmatpush1.msra.mxu0 0.0
    %433 = vmatprep.subr.mxu0 0.0
    %434 = vmatpush1.msra.mxu0 0.0
    %435 = vmatprep.subr.mxu0 0.0
    %436 = vmatpush1.msra.mxu0 %v400
    %437 = vmatprep.subr.mxu0 0.0
    %438 = vmatpush2.msra.mxu0 0.0
    %439 = vmatprep.subr.mxu0 0.0
    %440 = vmatpush2.msra.mxu0 0.0
    %441 = vmatprep.subr.mxu0 0.0
    %442 = vmatpush2.msra.mxu0 0.0
    %443 = vmatprep.subr.mxu0 0.0
    %444 = vmatpush2.msra.mxu0 0.0
    %445 = vmatprep.subr.mxu0 0.0
    %446 = vmatpush2.msra.mxu0 0.0
    %447 = vmatprep.subr.mxu0 0.0
    %448 = vmatpush2.msra.mxu0 0.0
    %449 = vmatprep.subr.mxu0 0.0
    %450 = vmatpush2.msra.mxu0 0.0
    %451 = vmatprep.subr.mxu0 0.0
    %452 = vmatpush2.msra.mxu0 0.0
    %453 = vmatprep.subr.mxu0 0.0
    %454 = vmatpush2.msra.mxu0 0.0
    %455 = vmatprep.subr.mxu0 0.0
    %456 = vmatpush2.msra.mxu0 0.0
    %457 = vmatprep.subr.mxu0 0.0
    %458 = vmatpush2.msra.mxu0 0.0
    %459 = vmatprep.subr.mxu0 0.0
    %460 = vmatpush2.msra.mxu0 0.0
    %461 = vmatprep.subr.mxu0 0.0
    %462 = vmatpush2.msra.mxu0 0.0
    %463 = vmatprep.subr.mxu0 0.0
    %464 = vmatpush2.msra.mxu0 0.0
    %465 = vmatprep.subr.mxu0 0.0
    %466 = vmatpush2.msra.mxu0 0.0
    %467 = vmatprep.subr.mxu0 0.0
    %468 = vmatpush2.msra.mxu0 0.0
    %469 = vmatprep.mubr.f32.mxu0 0.0
    %470 = vmatmul.mubr.f32.gmra.mxu0 %v403
    %v471 = vpop.f32.mrf.mxu0
    %v472 = vadd.f32 0.0, %v471
    %v473 = vpop.f32.mrf.mxu0
    %474 = vdwg.mxu0
    %v475 = vld [vmem:[#allocation4 + $0x18] sm:$0xff]
    %476 = vrot.lane.b32.xlu0 %v136, 120
    %v477 = vpop.permute.xlu0 %476
    %478 = vrot.lane.b32.xlu0 %v136, 104
    %v479 = vpop.permute.xlu0 %478
    %v480 = vsel %vm147, %v477, 0
    %v482 = vsel %vm147, %v479, 0
    %484 = vmatprep.subr.mxu0 0.0
    %485 = vmatpush1.xpose.msra.mxu0 0.0
    %486 = vmatprep.subr.mxu0 0.0
    %487 = vmatpush1.xpose.msra.mxu0 0.0
    %488 = vmatprep.subr.mxu0 0.0
    %489 = vmatpush1.xpose.msra.mxu0 0.0
    %490 = vmatprep.subr.mxu0 0.0
    %491 = vmatpush1.xpose.msra.mxu0 0.0
    %492 = vmatprep.subr.mxu0 0.0
    %493 = vmatpush1.xpose.msra.mxu0 0.0
    %494 = vmatprep.subr.mxu0 0.0
    %495 = vmatpush1.xpose.msra.mxu0 0.0
    %496 = vmatprep.subr.mxu0 0.0
    %497 = vmatpush1.xpose.msra.mxu0 0.0
    %498 = vmatprep.subr.mxu0 0.0
    %499 = vmatpush1.xpose.msra.mxu0 0.0
    %500 = vmatprep.subr.mxu0 0.0
    %501 = vmatpush1.xpose.msra.mxu0 0.0
    %502 = vmatprep.subr.mxu0 0.0
    %503 = vmatpush1.xpose.msra.mxu0 0.0
    %504 = vmatprep.subr.mxu0 0.0
    %505 = vmatpush1.xpose.msra.mxu0 0.0
    %506 = vmatprep.subr.mxu0 0.0
    %507 = vmatpush1.xpose.msra.mxu0 0.0
    %508 = vmatprep.subr.mxu0 0.0
    %509 = vmatpush1.xpose.msra.mxu0 0.0
    %510 = vmatprep.subr.mxu0 0.0
    %511 = vmatpush1.xpose.msra.mxu0 0.0
    %512 = vmatprep.subr.mxu0 0.0
    %513 = vmatpush1.xpose.msra.mxu0 0.0
    %514 = vmatprep.subr.mxu0 0.0
    %515 = vmatpush1.xpose.msra.mxu0 %v482
    %516 = vmatprep.subr.mxu0 0.0
    %517 = vmatpush2.xpose.msra.mxu0 0.0
    %518 = vmatprep.subr.mxu0 0.0
    %519 = vmatpush2.xpose.msra.mxu0 0.0
    %520 = vmatprep.subr.mxu0 0.0
    %521 = vmatpush2.xpose.msra.mxu0 0.0
    %522 = vmatprep.subr.mxu0 0.0
    %523 = vmatpush2.xpose.msra.mxu0 0.0
    %524 = vmatprep.subr.mxu0 0.0
    %525 = vmatpush2.xpose.msra.mxu0 0.0
    %526 = vmatprep.subr.mxu0 0.0
    %527 = vmatpush2.xpose.msra.mxu0 0.0
    %528 = vmatprep.subr.mxu0 0.0
    %529 = vmatpush2.xpose.msra.mxu0 0.0
    %530 = vmatprep.subr.mxu0 0.0
    %531 = vmatpush2.xpose.msra.mxu0 0.0
    %532 = vmatprep.subr.mxu0 0.0
    %533 = vmatpush2.xpose.msra.mxu0 0.0
    %534 = vmatprep.subr.mxu0 0.0
    %535 = vmatpush2.xpose.msra.mxu0 0.0
    %536 = vmatprep.subr.mxu0 0.0
    %537 = vmatpush2.xpose.msra.mxu0 0.0
    %538 = vmatprep.subr.mxu0 0.0
    %539 = vmatpush2.xpose.msra.mxu0 0.0
    %540 = vmatprep.subr.mxu0 0.0
    %541 = vmatpush2.xpose.msra.mxu0 0.0
    %542 = vmatprep.subr.mxu0 0.0
    %543 = vmatpush2.xpose.msra.mxu0 0.0
    %544 = vmatprep.subr.mxu0 0.0
    %545 = vmatpush2.xpose.msra.mxu0 0.0
    %546 = vmatprep.subr.mxu0 0.0
    %547 = vmatpush2.xpose.msra.mxu0 0.0
    %548 = vmatprep.mubr.f32.mxu0 0.0
    %549 = vmatmul.mubr.f32.gmra.mxu0 %v480
    %v550 = vpop.f32.mrf.mxu0
    %v551 = vadd.f32 0.0, %v550
    %v552 = vpop.f32.mrf.mxu0
    %553 = vdwg.mxu0
    %554 = vrot.lane.b32.xlu0 %v141, 120
    %v555 = vpop.permute.xlu0 %554
    %556 = vrot.lane.b32.xlu0 %v141, 104
    %v557 = vpop.permute.xlu0 %556
    %v558 = vsel %vm147, %v555, 0
    %v560 = vsel %vm147, %v557, 0
    %562 = vmatprep.subr.mxu0 0.0
    %563 = vmatpush1.xpose.msra.mxu0 0.0
    %564 = vmatprep.subr.mxu0 0.0
    %565 = vmatpush1.xpose.msra.mxu0 0.0
    %566 = vmatprep.subr.mxu0 0.0
    %567 = vmatpush1.xpose.msra.mxu0 0.0
    %568 = vmatprep.subr.mxu0 0.0
    %569 = vmatpush1.xpose.msra.mxu0 0.0
    %570 = vmatprep.subr.mxu0 0.0
    %571 = vmatpush1.xpose.msra.mxu0 0.0
    %572 = vmatprep.subr.mxu0 0.0
    %573 = vmatpush1.xpose.msra.mxu0 0.0
    %574 = vmatprep.subr.mxu0 0.0
    %575 = vmatpush1.xpose.msra.mxu0 0.0
    %576 = vmatprep.subr.mxu0 0.0
    %577 = vmatpush1.xpose.msra.mxu0 0.0
    %578 = vmatprep.subr.mxu0 0.0
    %579 = vmatpush1.xpose.msra.mxu0 0.0
    %580 = vmatprep.subr.mxu0 0.0
    %581 = vmatpush1.xpose.msra.mxu0 0.0
    %582 = vmatprep.subr.mxu0 0.0
    %583 = vmatpush1.xpose.msra.mxu0 0.0
    %584 = vmatprep.subr.mxu0 0.0
    %585 = vmatpush1.xpose.msra.mxu0 0.0
    %586 = vmatprep.subr.mxu0 0.0
    %587 = vmatpush1.xpose.msra.mxu0 0.0
    %588 = vmatprep.subr.mxu0 0.0
    %589 = vmatpush1.xpose.msra.mxu0 0.0
    %590 = vmatprep.subr.mxu0 0.0
    %591 = vmatpush1.xpose.msra.mxu0 0.0
    %592 = vmatprep.subr.mxu0 0.0
    %593 = vmatpush1.xpose.msra.mxu0 %v560
    %594 = vmatprep.subr.mxu0 0.0
    %595 = vmatpush2.xpose.msra.mxu0 0.0
    %596 = vmatprep.subr.mxu0 0.0
    %597 = vmatpush2.xpose.msra.mxu0 0.0
    %598 = vmatprep.subr.mxu0 0.0
    %599 = vmatpush2.xpose.msra.mxu0 0.0
    %600 = vmatprep.subr.mxu0 0.0
    %601 = vmatpush2.xpose.msra.mxu0 0.0
    %602 = vmatprep.subr.mxu0 0.0
    %603 = vmatpush2.xpose.msra.mxu0 0.0
    %604 = vmatprep.subr.mxu0 0.0
    %605 = vmatpush2.xpose.msra.mxu0 0.0
    %606 = vmatprep.subr.mxu0 0.0
    %607 = vmatpush2.xpose.msra.mxu0 0.0
    %608 = vmatprep.subr.mxu0 0.0
    %609 = vmatpush2.xpose.msra.mxu0 0.0
    %610 = vmatprep.subr.mxu0 0.0
    %611 = vmatpush2.xpose.msra.mxu0 0.0
    %612 = vmatprep.subr.mxu0 0.0
    %613 = vmatpush2.xpose.msra.mxu0 0.0
    %614 = vmatprep.subr.mxu0 0.0
    %615 = vmatpush2.xpose.msra.mxu0 0.0
    %616 = vmatprep.subr.mxu0 0.0
    %617 = vmatpush2.xpose.msra.mxu0 0.0
    %618 = vmatprep.subr.mxu0 0.0
    %619 = vmatpush2.xpose.msra.mxu0 0.0
    %620 = vmatprep.subr.mxu0 0.0
    %621 = vmatpush2.xpose.msra.mxu0 0.0
    %622 = vmatprep.subr.mxu0 0.0
    %623 = vmatpush2.xpose.msra.mxu0 0.0
    %624 = vmatprep.subr.mxu0 0.0
    %625 = vmatpush2.xpose.msra.mxu0 0.0
    %626 = vmatprep.mubr.f32.mxu0 0.0
    %627 = vmatmul.mubr.f32.gmra.mxu0 %v558
    %v628 = vpop.f32.mrf.mxu0
    %v629 = vadd.f32 0.0, %v628
    %v630 = vpop.f32.mrf.mxu0
    %631 = vdwg.mxu0
    %v632 = vmul.f32 %v551, 0.35355338
    %v633 = vmul.f32 %v629, 0.35355338
    %v634 = vsel %vm147, %v632, -inf
    %635 = vmax.xlane.f32.xlu0 %v634
    %v636 = vpop.xlane.xlu0 %635
    %v637 = vsel %vm147, %v633, -inf
    %638 = vmax.xlane.f32.xlu0 %v637
    %v639 = vpop.xlane.xlu0 %638
    %v640 = vsub.f32 %v632, %v636
    %v641 = vsub.f32 %v633, %v639
    %v642 = vmul.f32 %v640, 1.442695
    %v643 = vpow.pop %v642
    %v644 = vmul.f32 %v641, 1.442695
    %v645 = vpow.pop %v644
    %v646 = vsel %vm147, %v643, 0.0
    %647 = vadd.xlane.f32.xlu0 %v646
    %v648 = vpop.xlane.xlu0 %647
    %v649 = vsel %vm147, %v645, 0.0
    %650 = vadd.xlane.f32.xlu0 %v649
    %v651 = vpop.xlane.xlu0 %650
    %v652 = vrcp.pop %v648
    %v653 = vmul.f32 %v643, %v652
    %v654 = vrcp.pop %v651
    %v655 = vmul.f32 %v645, %v654
    %656 = vrot.lane.b32.xlu0 %v136, 88
    %v657 = vpop.permute.xlu0 %656
    %v660 = vsel %vm147, %v653, 0
    %662 = vmatprep.subr.mxu0 0.0
    %663 = vmatpush1.msra.mxu0 0.0
    %664 = vmatprep.subr.mxu0 0.0
    %665 = vmatpush1.msra.mxu0 0.0
    %666 = vmatprep.subr.mxu0 0.0
    %667 = vmatpush1.msra.mxu0 0.0
    %668 = vmatprep.subr.mxu0 0.0
    %669 = vmatpush1.msra.mxu0 0.0
    %670 = vmatprep.subr.mxu0 0.0
    %671 = vmatpush1.msra.mxu0 0.0
    %672 = vmatprep.subr.mxu0 0.0
    %673 = vmatpush1.msra.mxu0 0.0
    %674 = vmatprep.subr.mxu0 0.0
    %675 = vmatpush1.msra.mxu0 0.0
    %676 = vmatprep.subr.mxu0 0.0
    %677 = vmatpush1.msra.mxu0 0.0
    %678 = vmatprep.subr.mxu0 0.0
    %679 = vmatpush1.msra.mxu0 0.0
    %680 = vmatprep.subr.mxu0 0.0
    %681 = vmatpush1.msra.mxu0 0.0
    %682 = vmatprep.subr.mxu0 0.0
    %683 = vmatpush1.msra.mxu0 0.0
    %684 = vmatprep.subr.mxu0 0.0
    %685 = vmatpush1.msra.mxu0 0.0
    %686 = vmatprep.subr.mxu0 0.0
    %687 = vmatpush1.msra.mxu0 0.0
    %688 = vmatprep.subr.mxu0 0.0
    %689 = vmatpush1.msra.mxu0 0.0
    %690 = vmatprep.subr.mxu0 0.0
    %691 = vmatpush1.msra.mxu0 0.0
    %692 = vmatprep.subr.mxu0 0.0
    %693 = vmatpush1.msra.mxu0 %v657
    %694 = vmatprep.subr.mxu0 0.0
    %695 = vmatpush2.msra.mxu0 0.0
    %696 = vmatprep.subr.mxu0 0.0
    %697 = vmatpush2.msra.mxu0 0.0
    %698 = vmatprep.subr.mxu0 0.0
    %699 = vmatpush2.msra.mxu0 0.0
    %700 = vmatprep.subr.mxu0 0.0
    %701 = vmatpush2.msra.mxu0 0.0
    %702 = vmatprep.subr.mxu0 0.0
    %703 = vmatpush2.msra.mxu0 0.0
    %704 = vmatprep.subr.mxu0 0.0
    %705 = vmatpush2.msra.mxu0 0.0
    %706 = vmatprep.subr.mxu0 0.0
    %707 = vmatpush2.msra.mxu0 0.0
    %708 = vmatprep.subr.mxu0 0.0
    %709 = vmatpush2.msra.mxu0 0.0
    %710 = vmatprep.subr.mxu0 0.0
    %711 = vmatpush2.msra.mxu0 0.0
    %712 = vmatprep.subr.mxu0 0.0
    %713 = vmatpush2.msra.mxu0 0.0
    %714 = vmatprep.subr.mxu0 0.0
    %715 = vmatpush2.msra.mxu0 0.0
    %716 = vmatprep.subr.mxu0 0.0
    %717 = vmatpush2.msra.mxu0 0.0
    %718 = vmatprep.subr.mxu0 0.0
    %719 = vmatpush2.msra.mxu0 0.0
    %720 = vmatprep.subr.mxu0 0.0
    %721 = vmatpush2.msra.mxu0 0.0
    %722 = vmatprep.subr.mxu0 0.0
    %723 = vmatpush2.msra.mxu0 0.0
    %724 = vmatprep.subr.mxu0 0.0
    %725 = vmatpush2.msra.mxu0 0.0
    %726 = vmatprep.mubr.f32.mxu0 0.0
    %727 = vmatmul.mubr.f32.gmra.mxu0 %v660
    %v728 = vpop.f32.mrf.mxu0
    %v729 = vadd.f32 0.0, %v728
    %v730 = vpop.f32.mrf.mxu0
    %731 = vdwg.mxu0
    %732 = vrot.lane.b32.xlu0 %v141, 88
    %v733 = vpop.permute.xlu0 %732
    %v736 = vsel %vm147, %v655, 0
    %738 = vmatprep.subr.mxu0 0.0
    %739 = vmatpush1.msra.mxu0 0.0
    %740 = vmatprep.subr.mxu0 0.0
    %741 = vmatpush1.msra.mxu0 0.0
    %742 = vmatprep.subr.mxu0 0.0
    %743 = vmatpush1.msra.mxu0 0.0
    %744 = vmatprep.subr.mxu0 0.0
    %745 = vmatpush1.msra.mxu0 0.0
    %746 = vmatprep.subr.mxu0 0.0
    %747 = vmatpush1.msra.mxu0 0.0
    %748 = vmatprep.subr.mxu0 0.0
    %749 = vmatpush1.msra.mxu0 0.0
    %750 = vmatprep.subr.mxu0 0.0
    %751 = vmatpush1.msra.mxu0 0.0
    %752 = vmatprep.subr.mxu0 0.0
    %753 = vmatpush1.msra.mxu0 0.0
    %754 = vmatprep.subr.mxu0 0.0
    %755 = vmatpush1.msra.mxu0 0.0
    %756 = vmatprep.subr.mxu0 0.0
    %757 = vmatpush1.msra.mxu0 0.0
    %758 = vmatprep.subr.mxu0 0.0
    %759 = vmatpush1.msra.mxu0 0.0
    %760 = vmatprep.subr.mxu0 0.0
    %761 = vmatpush1.msra.mxu0 0.0
    %762 = vmatprep.subr.mxu0 0.0
    %763 = vmatpush1.msra.mxu0 0.0
    %764 = vmatprep.subr.mxu0 0.0
    %765 = vmatpush1.msra.mxu0 0.0
    %766 = vmatprep.subr.mxu0 0.0
    %767 = vmatpush1.msra.mxu0 0.0
    %768 = vmatprep.subr.mxu0 0.0
    %769 = vmatpush1.msra.mxu0 %v733
    %770 = vmatprep.subr.mxu0 0.0
    %771 = vmatpush2.msra.mxu0 0.0
    %772 = vmatprep.subr.mxu0 0.0
    %773 = vmatpush2.msra.mxu0 0.0
    %774 = vmatprep.subr.mxu0 0.0
    %775 = vmatpush2.msra.mxu0 0.0
    %776 = vmatprep.subr.mxu0 0.0
    %777 = vmatpush2.msra.mxu0 0.0
    %778 = vmatprep.subr.mxu0 0.0
    %779 = vmatpush2.msra.mxu0 0.0
    %780 = vmatprep.subr.mxu0 0.0
    %781 = vmatpush2.msra.mxu0 0.0
    %782 = vmatprep.subr.mxu0 0.0
    %783 = vmatpush2.msra.mxu0 0.0
    %784 = vmatprep.subr.mxu0 0.0
    %785 = vmatpush2.msra.mxu0 0.0
    %786 = vmatprep.subr.mxu0 0.0
    %787 = vmatpush2.msra.mxu0 0.0
    %788 = vmatprep.subr.mxu0 0.0
    %789 = vmatpush2.msra.mxu0 0.0
    %790 = vmatprep.subr.mxu0 0.0
    %791 = vmatpush2.msra.mxu0 0.0
    %792 = vmatprep.subr.mxu0 0.0
    %793 = vmatpush2.msra.mxu0 0.0
    %794 = vmatprep.subr.mxu0 0.0
    %795 = vmatpush2.msra.mxu0 0.0
    %796 = vmatprep.subr.mxu0 0.0
    %797 = vmatpush2.msra.mxu0 0.0
    %798 = vmatprep.subr.mxu0 0.0
    %799 = vmatpush2.msra.mxu0 0.0
    %800 = vmatprep.subr.mxu0 0.0
    %801 = vmatpush2.msra.mxu0 0.0
    %802 = vmatprep.mubr.f32.mxu0 0.0
    %803 = vmatmul.mubr.f32.gmra.mxu0 %v736
    %v804 = vpop.f32.mrf.mxu0
    %v805 = vadd.f32 0.0, %v804
    %v806 = vpop.f32.mrf.mxu0
    %807 = vdwg.mxu0
    %v808 = vld [vmem:[#allocation4 + $0x20] sm:$0xff]
    %v810 = vsel %vm147, %v729, 0
    %v813 = vsel %vm147, %v805, 0
    %815 = vmatprep.subr.mxu0 0.0
    %816 = vmatpush1.msra.mxu0 0.0
    %817 = vmatprep.subr.mxu0 0.0
    %818 = vmatpush1.msra.mxu0 0.0
    %819 = vmatprep.subr.mxu0 0.0
    %820 = vmatpush1.msra.mxu0 0.0
    %821 = vmatprep.subr.mxu0 0.0
    %822 = vmatpush1.msra.mxu0 0.0
    %823 = vmatprep.subr.mxu0 0.0
    %824 = vmatpush1.msra.mxu0 0.0
    %825 = vmatprep.subr.mxu0 0.0
    %826 = vmatpush1.msra.mxu0 0.0
    %827 = vmatprep.subr.mxu0 0.0
    %828 = vmatpush1.msra.mxu0 0.0
    %829 = vmatprep.subr.mxu0 0.0
    %830 = vmatpush1.msra.mxu0 0.0
    %831 = vmatprep.subr.mxu0 0.0
    %832 = vmatpush1.msra.mxu0 0.0
    %833 = vmatprep.subr.mxu0 0.0
    %834 = vmatpush1.msra.mxu0 0.0
    %835 = vmatprep.subr.mxu0 0.0
    %836 = vmatpush1.msra.mxu0 0.0
    %837 = vmatprep.subr.mxu0 0.0
    %838 = vmatpush1.msra.mxu0 0.0
    %839 = vmatprep.subr.mxu0 0.0
    %840 = vmatpush1.msra.mxu0 0.0
    %841 = vmatprep.subr.mxu0 0.0
    %842 = vmatpush1.msra.mxu0 0.0
    %843 = vmatprep.subr.mxu0 0.0
    %844 = vmatpush1.msra.mxu0 0.0
    %845 = vmatprep.subr.mxu0 0.0
    %846 = vmatpush1.msra.mxu0 %v808
    %847 = vmatprep.subr.mxu0 0.0
    %848 = vmatpush2.msra.mxu0 0.0
    %849 = vmatprep.subr.mxu0 0.0
    %850 = vmatpush2.msra.mxu0 0.0
    %851 = vmatprep.subr.mxu0 0.0
    %852 = vmatpush2.msra.mxu0 0.0
    %853 = vmatprep.subr.mxu0 0.0
    %854 = vmatpush2.msra.mxu0 0.0
    %855 = vmatprep.subr.mxu0 0.0
    %856 = vmatpush2.msra.mxu0 0.0
    %857 = vmatprep.subr.mxu0 0.0
    %858 = vmatpush2.msra.mxu0 0.0
    %859 = vmatprep.subr.mxu0 0.0
    %860 = vmatpush2.msra.mxu0 0.0
    %861 = vmatprep.subr.mxu0 0.0
    %862 = vmatpush2.msra.mxu0 0.0
    %863 = vmatprep.subr.mxu0 0.0
    %864 = vmatpush2.msra.mxu0 0.0
    %865 = vmatprep.subr.mxu0 0.0
    %866 = vmatpush2.msra.mxu0 0.0
    %867 = vmatprep.subr.mxu0 0.0
    %868 = vmatpush2.msra.mxu0 0.0
    %869 = vmatprep.subr.mxu0 0.0
    %870 = vmatpush2.msra.mxu0 0.0
    %871 = vmatprep.subr.mxu0 0.0
    %872 = vmatpush2.msra.mxu0 0.0
    %873 = vmatprep.subr.mxu0 0.0
    %874 = vmatpush2.msra.mxu0 0.0
    %875 = vmatprep.subr.mxu0 0.0
    %876 = vmatpush2.msra.mxu0 0.0
    %877 = vmatprep.subr.mxu0 0.0
    %878 = vmatpush2.msra.mxu0 0.0
    %879 = vmatprep.mubr.f32.mxu0 0.0
    %880 = vmatmul.mubr.f32.gmra.mxu0 %v810
    %v881 = vpop.f32.mrf.mxu0
    %v882 = vadd.f32 0.0, %v881
    %v883 = vpop.f32.mrf.mxu0
    %884 = vmatprep.mubr.f32.mxu0 0.0
    %885 = vmatmul.mubr.f32.gmra.mxu0 %v813
    %v886 = vpop.f32.mrf.mxu0
    %v887 = vadd.f32 0.0, %v886
    %v888 = vpop.f32.mrf.mxu0
    %889 = vdwg.mxu0
    %v891 = vsel %vm147, %v396, 0
    %v894 = vsel %vm147, %v472, 0
    %896 = vmatprep.subr.mxu0 0.0
    %897 = vmatpush1.msra.mxu0 0.0
    %898 = vmatprep.subr.mxu0 0.0
    %899 = vmatpush1.msra.mxu0 0.0
    %900 = vmatprep.subr.mxu0 0.0
    %901 = vmatpush1.msra.mxu0 0.0
    %902 = vmatprep.subr.mxu0 0.0
    %903 = vmatpush1.msra.mxu0 0.0
    %904 = vmatprep.subr.mxu0 0.0
    %905 = vmatpush1.msra.mxu0 0.0
    %906 = vmatprep.subr.mxu0 0.0
    %907 = vmatpush1.msra.mxu0 0.0
    %908 = vmatprep.subr.mxu0 0.0
    %909 = vmatpush1.msra.mxu0 0.0
    %910 = vmatprep.subr.mxu0 0.0
    %911 = vmatpush1.msra.mxu0 0.0
    %912 = vmatprep.subr.mxu0 0.0
    %913 = vmatpush1.msra.mxu0 0.0
    %914 = vmatprep.subr.mxu0 0.0
    %915 = vmatpush1.msra.mxu0 0.0
    %916 = vmatprep.subr.mxu0 0.0
    %917 = vmatpush1.msra.mxu0 0.0
    %918 = vmatprep.subr.mxu0 0.0
    %919 = vmatpush1.msra.mxu0 0.0
    %920 = vmatprep.subr.mxu0 0.0
    %921 = vmatpush1.msra.mxu0 0.0
    %922 = vmatprep.subr.mxu0 0.0
    %923 = vmatpush1.msra.mxu0 0.0
    %924 = vmatprep.subr.mxu0 0.0
    %925 = vmatpush1.msra.mxu0 0.0
    %926 = vmatprep.subr.mxu0 0.0
    %927 = vmatpush1.msra.mxu0 %v475
    %928 = vmatprep.subr.mxu0 0.0
    %929 = vmatpush2.msra.mxu0 0.0
    %930 = vmatprep.subr.mxu0 0.0
    %931 = vmatpush2.msra.mxu0 0.0
    %932 = vmatprep.subr.mxu0 0.0
    %933 = vmatpush2.msra.mxu0 0.0
    %934 = vmatprep.subr.mxu0 0.0
    %935 = vmatpush2.msra.mxu0 0.0
    %936 = vmatprep.subr.mxu0 0.0
    %937 = vmatpush2.msra.mxu0 0.0
    %938 = vmatprep.subr.mxu0 0.0
    %939 = vmatpush2.msra.mxu0 0.0
    %940 = vmatprep.subr.mxu0 0.0
    %941 = vmatpush2.msra.mxu0 0.0
    %942 = vmatprep.subr.mxu0 0.0
    %943 = vmatpush2.msra.mxu0 0.0
    %944 = vmatprep.subr.mxu0 0.0
    %945 = vmatpush2.msra.mxu0 0.0
    %946 = vmatprep.subr.mxu0 0.0
    %947 = vmatpush2.msra.mxu0 0.0
    %948 = vmatprep.subr.mxu0 0.0
    %949 = vmatpush2.msra.mxu0 0.0
    %950 = vmatprep.subr.mxu0 0.0
    %951 = vmatpush2.msra.mxu0 0.0
    %952 = vmatprep.subr.mxu0 0.0
    %953 = vmatpush2.msra.mxu0 0.0
    %954 = vmatprep.subr.mxu0 0.0
    %955 = vmatpush2.msra.mxu0 0.0
    %956 = vmatprep.subr.mxu0 0.0
    %957 = vmatpush2.msra.mxu0 0.0
    %958 = vmatprep.subr.mxu0 0.0
    %959 = vmatpush2.msra.mxu0 0.0
    %960 = vmatprep.mubr.f32.mxu0 0.0
    %961 = vmatmul.mubr.f32.gmra.mxu0 %v891
    %v962 = vpop.f32.mrf.mxu0
    %v963 = vadd.f32 %v882, %v962
    %v964 = vpop.f32.mrf.mxu0
    %965 = vmatprep.mubr.f32.mxu0 0.0
    %966 = vmatmul.mubr.f32.gmra.mxu0 %v894
    %v967 = vpop.f32.mrf.mxu0
    %v968 = vadd.f32 %v887, %v967
    %v969 = vpop.f32.mrf.mxu0
    %970 = vdwg.mxu0
    %v971 = vld [vmem:[#allocation4 + $0x28] sm:$0x1]
    %v972 = vlaneseq
    %v973 = vshrl.u32 %v972, 7
    %v974 = vsub.s32 0, %v973
    %v975 = vrot.slane %v971, %v974
    %v976 = vadd.f32 %v963, %v975
    %v977 = vadd.f32 %v968, %v975
    %v978 = vadd.f32 %v53, %v976
    %v979 = vadd.f32 %v54, %v977
    %v980 = vsel %vm62, %v978, 0.0
    %981 = vadd.xlane.f32.xlu0 %v980
    %v982 = vpop.xlane.xlu0 %981
    %v983 = vsel %vm62, %v979, 0.0
    %984 = vadd.xlane.f32.xlu0 %v983
    %v985 = vpop.xlane.xlu0 %984
    %v986 = vrcp.pop 16.0
    %v987 = vmul.f32 %v982, %v986
    %v988 = vmul.f32 %v985, %v986
    %v989 = vsub.f32 %v978, %v987
    %v990 = vsub.f32 %v979, %v988
    %v991 = vmul.f32 %v989, %v989
    %v992 = vmul.f32 %v990, %v990
    %v993 = vsel %vm62, %v991, 0.0
    %994 = vadd.xlane.f32.xlu0 %v993
    %v995 = vpop.xlane.xlu0 %994
    %v996 = vsel %vm62, %v992, 0.0
    %997 = vadd.xlane.f32.xlu0 %v996
    %v998 = vpop.xlane.xlu0 %997
    %v999 = vmul.f32 %v995, %v986
    %v1000 = vmul.f32 %v998, %v986
    %v1001 = vadd.f32 %v999, 1e-05
    %v1002 = vadd.f32 %v1000, 1e-05
    %v1003 = vrsqrt.pop %v1001
    %v1004 = vrsqrt.pop %v1002
    %v1005 = vmul.f32 %v989, %v1003
    %v1006 = vmul.f32 %v990, %v1004
    %v1007 = vld [vmem:[#allocation4 + $0x30] sm:$0xff]
    %v1008 = vld [vmem:[#allocation4 + $0x38] sm:$0xff]
    %v1009 = vld [vmem:[#allocation4 + $0x40] sm:$0xff]
    %v1010 = vld [vmem:[#allocation4 + $0x48] sm:$0xff]
    %v1013 = vrot.slane %v1005, 1
    %vm1014 = vcmask 1041409
    %v1015 = vsel %vm1014, %v1006, %v1013
    %v1016 = vsel %vm62, %v1015, 0
    %1018 = vmatprep.subr.mxu0 0.0
    %1019 = vmatpush1.msra.mxu0 0.0
    %1020 = vmatprep.subr.mxu0 0.0
    %1021 = vmatpush1.msra.mxu0 0.0
    %1022 = vmatprep.subr.mxu0 0.0
    %1023 = vmatpush1.msra.mxu0 0.0
    %1024 = vmatprep.subr.mxu0 0.0
    %1025 = vmatpush1.msra.mxu0 0.0
    %1026 = vmatprep.subr.mxu0 0.0
    %1027 = vmatpush1.msra.mxu0 0.0
    %1028 = vmatprep.subr.mxu0 0.0
    %1029 = vmatpush1.msra.mxu0 0.0
    %1030 = vmatprep.subr.mxu0 0.0
    %1031 = vmatpush1.msra.mxu0 0.0
    %1032 = vmatprep.subr.mxu0 0.0
    %1033 = vmatpush1.msra.mxu0 0.0
    %1034 = vmatprep.subr.mxu0 0.0
    %1035 = vmatpush1.msra.mxu0 0.0
    %1036 = vmatprep.subr.mxu0 0.0
    %1037 = vmatpush1.msra.mxu0 0.0
    %1038 = vmatprep.subr.mxu0 0.0
    %1039 = vmatpush1.msra.mxu0 0.0
    %1040 = vmatprep.subr.mxu0 0.0
    %1041 = vmatpush1.msra.mxu0 0.0
    %1042 = vmatprep.subr.mxu0 0.0
    %1043 = vmatpush1.msra.mxu0 0.0
    %1044 = vmatprep.subr.mxu0 0.0
    %1045 = vmatpush1.msra.mxu0 0.0
    %1046 = vmatprep.subr.mxu0 0.0
    %1047 = vmatpush1.msra.mxu0 %v1010
    %1048 = vmatprep.subr.mxu0 0.0
    %1049 = vmatpush1.msra.mxu0 %v1009
    %1050 = vmatprep.subr.mxu0 0.0
    %1051 = vmatpush2.msra.mxu0 0.0
    %1052 = vmatprep.subr.mxu0 0.0
    %1053 = vmatpush2.msra.mxu0 0.0
    %1054 = vmatprep.subr.mxu0 0.0
    %1055 = vmatpush2.msra.mxu0 0.0
    %1056 = vmatprep.subr.mxu0 0.0
    %1057 = vmatpush2.msra.mxu0 0.0
    %1058 = vmatprep.subr.mxu0 0.0
    %1059 = vmatpush2.msra.mxu0 0.0
    %1060 = vmatprep.subr.mxu0 0.0
    %1061 = vmatpush2.msra.mxu0 0.0
    %1062 = vmatprep.subr.mxu0 0.0
    %1063 = vmatpush2.msra.mxu0 0.0
    %1064 = vmatprep.subr.mxu0 0.0
    %1065 = vmatpush2.msra.mxu0 0.0
    %1066 = vmatprep.subr.mxu0 0.0
    %1067 = vmatpush2.msra.mxu0 0.0
    %1068 = vmatprep.subr.mxu0 0.0
    %1069 = vmatpush2.msra.mxu0 0.0
    %1070 = vmatprep.subr.mxu0 0.0
    %1071 = vmatpush2.msra.mxu0 0.0
    %1072 = vmatprep.subr.mxu0 0.0
    %1073 = vmatpush2.msra.mxu0 0.0
    %1074 = vmatprep.subr.mxu0 0.0
    %1075 = vmatpush2.msra.mxu0 0.0
    %1076 = vmatprep.subr.mxu0 0.0
    %1077 = vmatpush2.msra.mxu0 0.0
    %1078 = vmatprep.subr.mxu0 0.0
    %1079 = vmatpush2.msra.mxu0 0.0
    %1080 = vmatprep.subr.mxu0 0.0
    %1081 = vmatpush2.msra.mxu0 0.0
    %1082 = vmatprep.mubr.f32.mxu0 0.0
    %1083 = vmatmul.mubr.f32.gmra.mxu0 %v1016
    %v1084 = vpop.f32.mrf.mxu0
    %v1085 = vadd.f32 0.0, %v1084
    %v1086 = vpop.f32.mrf.mxu0
    %1087 = vdwg.mxu0
    %v1088 = vrot.slane %v1006, 7
    %v1089 = vsel %vm1014, %v1088, %v1005
    %v1090 = vsel %vm62, %v1089, 0
    %1092 = vmatprep.subr.mxu0 0.0
    %1093 = vmatpush1.msra.mxu0 0.0
    %1094 = vmatprep.subr.mxu0 0.0
    %1095 = vmatpush1.msra.mxu0 0.0
    %1096 = vmatprep.subr.mxu0 0.0
    %1097 = vmatpush1.msra.mxu0 0.0
    %1098 = vmatprep.subr.mxu0 0.0
    %1099 = vmatpush1.msra.mxu0 0.0
    %1100 = vmatprep.subr.mxu0 0.0
    %1101 = vmatpush1.msra.mxu0 0.0
    %1102 = vmatprep.subr.mxu0 0.0
    %1103 = vmatpush1.msra.mxu0 0.0
    %1104 = vmatprep.subr.mxu0 0.0
    %1105 = vmatpush1.msra.mxu0 0.0
    %1106 = vmatprep.subr.mxu0 0.0
    %1107 = vmatpush1.msra.mxu0 0.0
    %1108 = vmatprep.subr.mxu0 0.0
    %1109 = vmatpush1.msra.mxu0 0.0
    %1110 = vmatprep.subr.mxu0 0.0
    %1111 = vmatpush1.msra.mxu0 0.0
    %1112 = vmatprep.subr.mxu0 0.0
    %1113 = vmatpush1.msra.mxu0 0.0
    %1114 = vmatprep.subr.mxu0 0.0
    %1115 = vmatpush1.msra.mxu0 0.0
    %1116 = vmatprep.subr.mxu0 0.0
    %1117 = vmatpush1.msra.mxu0 0.0
    %1118 = vmatprep.subr.mxu0 0.0
    %1119 = vmatpush1.msra.mxu0 0.0
    %1120 = vmatprep.subr.mxu0 0.0
    %1121 = vmatpush1.msra.mxu0 %v1008
    %1122 = vmatprep.subr.mxu0 0.0
    %1123 = vmatpush1.msra.mxu0 %v1007
    %1124 = vmatprep.subr.mxu0 0.0
    %1125 = vmatpush2.msra.mxu0 0.0
    %1126 = vmatprep.subr.mxu0 0.0
    %1127 = vmatpush2.msra.mxu0 0.0
    %1128 = vmatprep.subr.mxu0 0.0
    %1129 = vmatpush2.msra.mxu0 0.0
    %1130 = vmatprep.subr.mxu0 0.0
    %1131 = vmatpush2.msra.mxu0 0.0
    %1132 = vmatprep.subr.mxu0 0.0
    %1133 = vmatpush2.msra.mxu0 0.0
    %1134 = vmatprep.subr.mxu0 0.0
    %1135 = vmatpush2.msra.mxu0 0.0
    %1136 = vmatprep.subr.mxu0 0.0
    %1137 = vmatpush2.msra.mxu0 0.0
    %1138 = vmatprep.subr.mxu0 0.0
    %1139 = vmatpush2.msra.mxu0 0.0
    %1140 = vmatprep.subr.mxu0 0.0
    %1141 = vmatpush2.msra.mxu0 0.0
    %1142 = vmatprep.subr.mxu0 0.0
    %1143 = vmatpush2.msra.mxu0 0.0
    %1144 = vmatprep.subr.mxu0 0.0
    %1145 = vmatpush2.msra.mxu0 0.0
    %1146 = vmatprep.subr.mxu0 0.0
    %1147 = vmatpush2.msra.mxu0 0.0
    %1148 = vmatprep.subr.mxu0 0.0
    %1149 = vmatpush2.msra.mxu0 0.0
    %1150 = vmatprep.subr.mxu0 0.0
    %1151 = vmatpush2.msra.mxu0 0.0
    %1152 = vmatprep.subr.mxu0 0.0
    %1153 = vmatpush2.msra.mxu0 0.0
    %1154 = vmatprep.subr.mxu0 0.0
    %1155 = vmatpush2.msra.mxu0 0.0
    %1156 = vmatprep.mubr.f32.mxu0 0.0
    %1157 = vmatmul.mubr.f32.gmra.mxu0 %v1090
    %v1158 = vpop.f32.mrf.mxu0
    %v1159 = vadd.f32 %v1085, %v1158
    %v1160 = vpop.f32.mrf.mxu0
    %1161 = vdwg.mxu0
    %v1162 = vld [vmem:[#allocation4 + $0x50] sm:$0xff]
    %v1163 = vld [vmem:[#allocation4 + $0x58] sm:$0xff]
    %v1164 = vrot.slane %v1005, 2
    %v1165 = vrot.slane %v1006, 1
    %v1166 = vsel %vm1014, %v1165, %v1164
    %v1167 = vsel %vm62, %v1166, 0
    %1169 = vmatprep.subr.mxu0 0.0
    %1170 = vmatpush1.msra.mxu0 0.0
    %1171 = vmatprep.subr.mxu0 0.0
    %1172 = vmatpush1.msra.mxu0 0.0
    %1173 = vmatprep.subr.mxu0 0.0
    %1174 = vmatpush1.msra.mxu0 0.0
    %1175 = vmatprep.subr.mxu0 0.0
    %1176 = vmatpush1.msra.mxu0 0.0
    %1177 = vmatprep.subr.mxu0 0.0
    %1178 = vmatpush1.msra.mxu0 0.0
    %1179 = vmatprep.subr.mxu0 0.0
    %1180 = vmatpush1.msra.mxu0 0.0
    %1181 = vmatprep.subr.mxu0 0.0
    %1182 = vmatpush1.msra.mxu0 0.0
    %1183 = vmatprep.subr.mxu0 0.0
    %1184 = vmatpush1.msra.mxu0 0.0
    %1185 = vmatprep.subr.mxu0 0.0
    %1186 = vmatpush1.msra.mxu0 0.0
    %1187 = vmatprep.subr.mxu0 0.0
    %1188 = vmatpush1.msra.mxu0 0.0
    %1189 = vmatprep.subr.mxu0 0.0
    %1190 = vmatpush1.msra.mxu0 0.0
    %1191 = vmatprep.subr.mxu0 0.0
    %1192 = vmatpush1.msra.mxu0 0.0
    %1193 = vmatprep.subr.mxu0 0.0
    %1194 = vmatpush1.msra.mxu0 0.0
    %1195 = vmatprep.subr.mxu0 0.0
    %1196 = vmatpush1.msra.mxu0 0.0
    %1197 = vmatprep.subr.mxu0 0.0
    %1198 = vmatpush1.msra.mxu0 %v1163
    %1199 = vmatprep.subr.mxu0 0.0
    %1200 = vmatpush1.msra.mxu0 %v1162
    %1201 = vmatprep.subr.mxu0 0.0
    %1202 = vmatpush2.msra.mxu0 0.0
    %1203 = vmatprep.subr.mxu0 0.0
    %1204 = vmatpush2.msra.mxu0 0.0
    %1205 = vmatprep.subr.mxu0 0.0
    %1206 = vmatpush2.msra.mxu0 0.0
    %1207 = vmatprep.subr.mxu0 0.0
    %1208 = vmatpush2.msra.mxu0 0.0
    %1209 = vmatprep.subr.mxu0 0.0
    %1210 = vmatpush2.msra.mxu0 0.0
    %1211 = vmatprep.subr.mxu0 0.0
    %1212 = vmatpush2.msra.mxu0 0.0
    %1213 = vmatprep.subr.mxu0 0.0
    %1214 = vmatpush2.msra.mxu0 0.0
    %1215 = vmatprep.subr.mxu0 0.0
    %1216 = vmatpush2.msra.mxu0 0.0
    %1217 = vmatprep.subr.mxu0 0.0
    %1218 = vmatpush2.msra.mxu0 0.0
    %1219 = vmatprep.subr.mxu0 0.0
    %1220 = vmatpush2.msra.mxu0 0.0
    %1221 = vmatprep.subr.mxu0 0.0
    %1222 = vmatpush2.msra.mxu0 0.0
    %1223 = vmatprep.subr.mxu0 0.0
    %1224 = vmatpush2.msra.mxu0 0.0
    %1225 = vmatprep.subr.mxu0 0.0
    %1226 = vmatpush2.msra.mxu0 0.0
    %1227 = vmatprep.subr.mxu0 0.0
    %1228 = vmatpush2.msra.mxu0 0.0
    %1229 = vmatprep.subr.mxu0 0.0
    %1230 = vmatpush2.msra.mxu0 0.0
    %1231 = vmatprep.subr.mxu0 0.0
    %1232 = vmatpush2.msra.mxu0 0.0
    %1233 = vmatprep.mubr.f32.mxu0 0.0
    %1234 = vmatmul.mubr.f32.gmra.mxu0 %v1167
    %v1235 = vpop.f32.mrf.mxu0
    %v1236 = vadd.f32 0.0, %v1235
    %v1237 = vpop.f32.mrf.mxu0
    %1238 = vdwg.mxu0
    %v1239 = vadd.f32 %v1159, %v1236
    %v1240 = vld [vmem:[#allocation4 + $0x60] sm:$0xff]
    %v1241 = vld [vmem:[#allocation4 + $0x68] sm:$0xff]
    %v1242 = vrot.slane %v1005, 3
    %v1243 = vrot.slane %v1006, 2
    %v1244 = vsel %vm1014, %v1243, %v1242
    %v1245 = vsel %vm62, %v1244, 0
    %1247 = vmatprep.subr.mxu0 0.0
    %1248 = vmatpush1.msra.mxu0 0.0
    %1249 = vmatprep.subr.mxu0 0.0
    %1250 = vmatpush1.msra.mxu0 0.0
    %1251 = vmatprep.subr.mxu0 0.0
    %1252 = vmatpush1.msra.mxu0 0.0
    %1253 = vmatprep.subr.mxu0 0.0
    %1254 = vmatpush1.msra.mxu0 0.0
    %1255 = vmatprep.subr.mxu0 0.0
    %1256 = vmatpush1.msra.mxu0 0.0
    %1257 = vmatprep.subr.mxu0 0.0
    %1258 = vmatpush1.msra.mxu0 0.0
    %1259 = vmatprep.subr.mxu0 0.0
    %1260 = vmatpush1.msra.mxu0 0.0
    %1261 = vmatprep.subr.mxu0 0.0
    %1262 = vmatpush1.msra.mxu0 0.0
    %1263 = vmatprep.subr.mxu0 0.0
    %1264 = vmatpush1.msra.mxu0 0.0
    %1265 = vmatprep.subr.mxu0 0.0
    %1266 = vmatpush1.msra.mxu0 0.0
    %1267 = vmatprep.subr.mxu0 0.0
    %1268 = vmatpush1.msra.mxu0 0.0
    %1269 = vmatprep.subr.mxu0 0.0
    %1270 = vmatpush1.msra.mxu0 0.0
    %1271 = vmatprep.subr.mxu0 0.0
    %1272 = vmatpush1.msra.mxu0 0.0
    %1273 = vmatprep.subr.mxu0 0.0
    %1274 = vmatpush1.msra.mxu0 0.0
    %1275 = vmatprep.subr.mxu0 0.0
    %1276 = vmatpush1.msra.mxu0 %v1241
    %1277 = vmatprep.subr.mxu0 0.0
    %1278 = vmatpush1.msra.mxu0 %v1240
    %1279 = vmatprep.subr.mxu0 0.0
    %1280 = vmatpush2.msra.mxu0 0.0
    %1281 = vmatprep.subr.mxu0 0.0
    %1282 = vmatpush2.msra.mxu0 0.0
    %1283 = vmatprep.subr.mxu0 0.0
    %1284 = vmatpush2.msra.mxu0 0.0
    %1285 = vmatprep.subr.mxu0 0.0
    %1286 = vmatpush2.msra.mxu0 0.0
    %1287 = vmatprep.subr.mxu0 0.0
    %1288 = vmatpush2.msra.mxu0 0.0
    %1289 = vmatprep.subr.mxu0 0.0
    %1290 = vmatpush2.msra.mxu0 0.0
    %1291 = vmatprep.subr.mxu0 0.0
    %1292 = vmatpush2.msra.mxu0 0.0
    %1293 = vmatprep.subr.mxu0 0.0
    %1294 = vmatpush2.msra.mxu0 0.0
    %1295 = vmatprep.subr.mxu0 0.0
    %1296 = vmatpush2.msra.mxu0 0.0
    %1297 = vmatprep.subr.mxu0 0.0
    %1298 = vmatpush2.msra.mxu0 0.0
    %1299 = vmatprep.subr.mxu0 0.0
    %1300 = vmatpush2.msra.mxu0 0.0
    %1301 = vmatprep.subr.mxu0 0.0
    %1302 = vmatpush2.msra.mxu0 0.0
    %1303 = vmatprep.subr.mxu0 0.0
    %1304 = vmatpush2.msra.mxu0 0.0
    %1305 = vmatprep.subr.mxu0 0.0
    %1306 = vmatpush2.msra.mxu0 0.0
    %1307 = vmatprep.subr.mxu0 0.0
    %1308 = vmatpush2.msra.mxu0 0.0
    %1309 = vmatprep.subr.mxu0 0.0
    %1310 = vmatpush2.msra.mxu0 0.0
    %1311 = vmatprep.mubr.f32.mxu0 0.0
    %1312 = vmatmul.mubr.f32.gmra.mxu0 %v1245
    %v1313 = vpop.f32.mrf.mxu0
    %v1314 = vadd.f32 0.0, %v1313
    %v1315 = vpop.f32.mrf.mxu0
    %1316 = vdwg.mxu0
    %v1317 = vadd.f32 %v1239, %v1314
    %v1318 = vld [vmem:[#allocation4 + $0x70] sm:$0xff]
    %v1319 = vld [vmem:[#allocation4 + $0x78] sm:$0xff]
    %v1320 = vrot.slane %v1005, 4
    %v1321 = vrot.slane %v1006, 3
    %v1322 = vsel %vm1014, %v1321, %v1320
    %v1323 = vsel %vm62, %v1322, 0
    %1325 = vmatprep.subr.mxu0 0.0
    %1326 = vmatpush1.msra.mxu0 0.0
    %1327 = vmatprep.subr.mxu0 0.0
    %1328 = vmatpush1.msra.mxu0 0.0
    %1329 = vmatprep.subr.mxu0 0.0
    %1330 = vmatpush1.msra.mxu0 0.0
    %1331 = vmatprep.subr.mxu0 0.0
    %1332 = vmatpush1.msra.mxu0 0.0
    %1333 = vmatprep.subr.mxu0 0.0
    %1334 = vmatpush1.msra.mxu0 0.0
    %1335 = vmatprep.subr.mxu0 0.0
    %1336 = vmatpush1.msra.mxu0 0.0
    %1337 = vmatprep.subr.mxu0 0.0
    %1338 = vmatpush1.msra.mxu0 0.0
    %1339 = vmatprep.subr.mxu0 0.0
    %1340 = vmatpush1.msra.mxu0 0.0
    %1341 = vmatprep.subr.mxu0 0.0
    %1342 = vmatpush1.msra.mxu0 0.0
    %1343 = vmatprep.subr.mxu0 0.0
    %1344 = vmatpush1.msra.mxu0 0.0
    %1345 = vmatprep.subr.mxu0 0.0
    %1346 = vmatpush1.msra.mxu0 0.0
    %1347 = vmatprep.subr.mxu0 0.0
    %1348 = vmatpush1.msra.mxu0 0.0
    %1349 = vmatprep.subr.mxu0 0.0
    %1350 = vmatpush1.msra.mxu0 0.0
    %1351 = vmatprep.subr.mxu0 0.0
    %1352 = vmatpush1.msra.mxu0 0.0
    %1353 = vmatprep.subr.mxu0 0.0
    %1354 = vmatpush1.msra.mxu0 %v1319
    %1355 = vmatprep.subr.mxu0 0.0
    %1356 = vmatpush1.msra.mxu0 %v1318
    %1357 = vmatprep.subr.mxu0 0.0
    %1358 = vmatpush2.msra.mxu0 0.0
    %1359 = vmatprep.subr.mxu0 0.0
    %1360 = vmatpush2.msra.mxu0 0.0
    %1361 = vmatprep.subr.mxu0 0.0
    %1362 = vmatpush2.msra.mxu0 0.0
    %1363 = vmatprep.subr.mxu0 0.0
    %1364 = vmatpush2.msra.mxu0 0.0
    %1365 = vmatprep.subr.mxu0 0.0
    %1366 = vmatpush2.msra.mxu0 0.0
    %1367 = vmatprep.subr.mxu0 0.0
    %1368 = vmatpush2.msra.mxu0 0.0
    %1369 = vmatprep.subr.mxu0 0.0
    %1370 = vmatpush2.msra.mxu0 0.0
    %1371 = vmatprep.subr.mxu0 0.0
    %1372 = vmatpush2.msra.mxu0 0.0
    %1373 = vmatprep.subr.mxu0 0.0
    %1374 = vmatpush2.msra.mxu0 0.0
    %1375 = vmatprep.subr.mxu0 0.0
    %1376 = vmatpush2.msra.mxu0 0.0
    %1377 = vmatprep.subr.mxu0 0.0
    %1378 = vmatpush2.msra.mxu0 0.0
    %1379 = vmatprep.subr.mxu0 0.0
    %1380 = vmatpush2.msra.mxu0 0.0
    %1381 = vmatprep.subr.mxu0 0.0
    %1382 = vmatpush2.msra.mxu0 0.0
    %1383 = vmatprep.subr.mxu0 0.0
    %1384 = vmatpush2.msra.mxu0 0.0
    %1385 = vmatprep.subr.mxu0 0.0
    %1386 = vmatpush2.msra.mxu0 0.0
    %1387 = vmatprep.subr.mxu0 0.0
    %1388 = vmatpush2.msra.mxu0 0.0
    %1389 = vmatprep.mubr.f32.mxu0 0.0
    %1390 = vmatmul.mubr.f32.gmra.mxu0 %v1323
    %v1391 = vpop.f32.mrf.mxu0
    %v1392 = vadd.f32 0.0, %v1391
    %v1393 = vpop.f32.mrf.mxu0
    %1394 = vdwg.mxu0
    %v1395 = vadd.f32 %v1317, %v1392
    %v1396 = vld [vmem:[#allocation4 + $0x80] sm:$0xff]
    %v1397 = vld [vmem:[#allocation4 + $0x88] sm:$0xff]
    %v1398 = vrot.slane %v1005, 5
    %v1399 = vrot.slane %v1006, 4
    %v1400 = vsel %vm1014, %v1399, %v1398
    %v1401 = vsel %vm62, %v1400, 0
    %1403 = vmatprep.subr.mxu0 0.0
    %1404 = vmatpush1.msra.mxu0 0.0
    %1405 = vmatprep.subr.mxu0 0.0
    %1406 = vmatpush1.msra.mxu0 0.0
    %1407 = vmatprep.subr.mxu0 0.0
    %1408 = vmatpush1.msra.mxu0 0.0
    %1409 = vmatprep.subr.mxu0 0.0
    %1410 = vmatpush1.msra.mxu0 0.0
    %1411 = vmatprep.subr.mxu0 0.0
    %1412 = vmatpush1.msra.mxu0 0.0
    %1413 = vmatprep.subr.mxu0 0.0
    %1414 = vmatpush1.msra.mxu0 0.0
    %1415 = vmatprep.subr.mxu0 0.0
    %1416 = vmatpush1.msra.mxu0 0.0
    %1417 = vmatprep.subr.mxu0 0.0
    %1418 = vmatpush1.msra.mxu0 0.0
    %1419 = vmatprep.subr.mxu0 0.0
    %1420 = vmatpush1.msra.mxu0 0.0
    %1421 = vmatprep.subr.mxu0 0.0
    %1422 = vmatpush1.msra.mxu0 0.0
    %1423 = vmatprep.subr.mxu0 0.0
    %1424 = vmatpush1.msra.mxu0 0.0
    %1425 = vmatprep.subr.mxu0 0.0
    %1426 = vmatpush1.msra.mxu0 0.0
    %1427 = vmatprep.subr.mxu0 0.0
    %1428 = vmatpush1.msra.mxu0 0.0
    %1429 = vmatprep.subr.mxu0 0.0
    %1430 = vmatpush1.msra.mxu0 0.0
    %1431 = vmatprep.subr.mxu0 0.0
    %1432 = vmatpush1.msra.mxu0 %v1397
    %1433 = vmatprep.subr.mxu0 0.0
    %1434 = vmatpush1.msra.mxu0 %v1396
    %1435 = vmatprep.subr.mxu0 0.0
    %1436 = vmatpush2.msra.mxu0 0.0
    %1437 = vmatprep.subr.mxu0 0.0
    %1438 = vmatpush2.msra.mxu0 0.0
    %1439 = vmatprep.subr.mxu0 0.0
    %1440 = vmatpush2.msra.mxu0 0.0
    %1441 = vmatprep.subr.mxu0 0.0
    %1442 = vmatpush2.msra.mxu0 0.0
    %1443 = vmatprep.subr.mxu0 0.0
    %1444 = vmatpush2.msra.mxu0 0.0
    %1445 = vmatprep.subr.mxu0 0.0
    %1446 = vmatpush2.msra.mxu0 0.0
    %1447 = vmatprep.subr.mxu0 0.0
    %1448 = vmatpush2.msra.mxu0 0.0
    %1449 = vmatprep.subr.mxu0 0.0
    %1450 = vmatpush2.msra.mxu0 0.0
    %1451 = vmatprep.subr.mxu0 0.0
    %1452 = vmatpush2.msra.mxu0 0.0
    %1453 = vmatprep.subr.mxu0 0.0
    %1454 = vmatpush2.msra.mxu0 0.0
    %1455 = vmatprep.subr.mxu0 0.0
    %1456 = vmatpush2.msra.mxu0 0.0
    %1457 = vmatprep.subr.mxu0 0.0
    %1458 = vmatpush2.msra.mxu0 0.0
    %1459 = vmatprep.subr.mxu0 0.0
    %1460 = vmatpush2.msra.mxu0 0.0
    %1461 = vmatprep.subr.mxu0 0.0
    %1462 = vmatpush2.msra.mxu0 0.0
    %1463 = vmatprep.subr.mxu0 0.0
    %1464 = vmatpush2.msra.mxu0 0.0
    %1465 = vmatprep.subr.mxu0 0.0
    %1466 = vmatpush2.msra.mxu0 0.0
    %1467 = vmatprep.mubr.f32.mxu0 0.0
    %1468 = vmatmul.mubr.f32.gmra.mxu0 %v1401
    %v1469 = vpop.f32.mrf.mxu0
    %v1470 = vadd.f32 0.0, %v1469
    %v1471 = vpop.f32.mrf.mxu0
    %1472 = vdwg.mxu0
    %v1473 = vadd.f32 %v1395, %v1470
    %v1474 = vld [vmem:[#allocation4 + $0x90] sm:$0xff]
    %v1475 = vld [vmem:[#allocation4 + $0x98] sm:$0xff]
    %v1476 = vrot.slane %v1005, 6
    %v1477 = vrot.slane %v1006, 5
    %v1478 = vsel %vm1014, %v1477, %v1476
    %v1479 = vsel %vm62, %v1478, 0
    %1481 = vmatprep.subr.mxu0 0.0
    %1482 = vmatpush1.msra.mxu0 0.0
    %1483 = vmatprep.subr.mxu0 0.0
    %1484 = vmatpush1.msra.mxu0 0.0
    %1485 = vmatprep.subr.mxu0 0.0
    %1486 = vmatpush1.msra.mxu0 0.0
    %1487 = vmatprep.subr.mxu0 0.0
    %1488 = vmatpush1.msra.mxu0 0.0
    %1489 = vmatprep.subr.mxu0 0.0
    %1490 = vmatpush1.msra.mxu0 0.0
    %1491 = vmatprep.subr.mxu0 0.0
    %1492 = vmatpush1.msra.mxu0 0.0
    %1493 = vmatprep.subr.mxu0 0.0
    %1494 = vmatpush1.msra.mxu0 0.0
    %1495 = vmatprep.subr.mxu0 0.0
    %1496 = vmatpush1.msra.mxu0 0.0
    %1497 = vmatprep.subr.mxu0 0.0
    %1498 = vmatpush1.msra.mxu0 0.0
    %1499 = vmatprep.subr.mxu0 0.0
    %1500 = vmatpush1.msra.mxu0 0.0
    %1501 = vmatprep.subr.mxu0 0.0
    %1502 = vmatpush1.msra.mxu0 0.0
    %1503 = vmatprep.subr.mxu0 0.0
    %1504 = vmatpush1.msra.mxu0 0.0
    %1505 = vmatprep.subr.mxu0 0.0
    %1506 = vmatpush1.msra.mxu0 0.0
    %1507 = vmatprep.subr.mxu0 0.0
    %1508 = vmatpush1.msra.mxu0 0.0
    %1509 = vmatprep.subr.mxu0 0.0
    %1510 = vmatpush1.msra.mxu0 %v1475
    %1511 = vmatprep.subr.mxu0 0.0
    %1512 = vmatpush1.msra.mxu0 %v1474
    %1513 = vmatprep.subr.mxu0 0.0
    %1514 = vmatpush2.msra.mxu0 0.0
    %1515 = vmatprep.subr.mxu0 0.0
    %1516 = vmatpush2.msra.mxu0 0.0
    %1517 = vmatprep.subr.mxu0 0.0
    %1518 = vmatpush2.msra.mxu0 0.0
    %1519 = vmatprep.subr.mxu0 0.0
    %1520 = vmatpush2.msra.mxu0 0.0
    %1521 = vmatprep.subr.mxu0 0.0
    %1522 = vmatpush2.msra.mxu0 0.0
    %1523 = vmatprep.subr.mxu0 0.0
    %1524 = vmatpush2.msra.mxu0 0.0
    %1525 = vmatprep.subr.mxu0 0.0
    %1526 = vmatpush2.msra.mxu0 0.0
    %1527 = vmatprep.subr.mxu0 0.0
    %1528 = vmatpush2.msra.mxu0 0.0
    %1529 = vmatprep.subr.mxu0 0.0
    %1530 = vmatpush2.msra.mxu0 0.0
    %1531 = vmatprep.subr.mxu0 0.0
    %1532 = vmatpush2.msra.mxu0 0.0
    %1533 = vmatprep.subr.mxu0 0.0
    %1534 = vmatpush2.msra.mxu0 0.0
    %1535 = vmatprep.subr.mxu0 0.0
    %1536 = vmatpush2.msra.mxu0 0.0
    %1537 = vmatprep.subr.mxu0 0.0
    %1538 = vmatpush2.msra.mxu0 0.0
    %1539 = vmatprep.subr.mxu0 0.0
    %1540 = vmatpush2.msra.mxu0 0.0
    %1541 = vmatprep.subr.mxu0 0.0
    %1542 = vmatpush2.msra.mxu0 0.0
    %1543 = vmatprep.subr.mxu0 0.0
    %1544 = vmatpush2.msra.mxu0 0.0
    %1545 = vmatprep.mubr.f32.mxu0 0.0
    %1546 = vmatmul.mubr.f32.gmra.mxu0 %v1479
    %v1547 = vpop.f32.mrf.mxu0
    %v1548 = vadd.f32 0.0, %v1547
    %v1549 = vpop.f32.mrf.mxu0
    %1550 = vdwg.mxu0
    %v1551 = vadd.f32 %v1473, %v1548
    %v1552 = vld [vmem:[#allocation4 + $0xa0] sm:$0xff]
    %v1553 = vld [vmem:[#allocation4 + $0xa8] sm:$0xff]
    %v1554 = vrot.slane %v1005, 7
    %v1555 = vrot.slane %v1006, 6
    %v1556 = vsel %vm1014, %v1555, %v1554
    %v1557 = vsel %vm62, %v1556, 0
    %1559 = vmatprep.subr.mxu0 0.0
    %1560 = vmatpush1.msra.mxu0 0.0
    %1561 = vmatprep.subr.mxu0 0.0
    %1562 = vmatpush1.msra.mxu0 0.0
    %1563 = vmatprep.subr.mxu0 0.0
    %1564 = vmatpush1.msra.mxu0 0.0
    %1565 = vmatprep.subr.mxu0 0.0
    %1566 = vmatpush1.msra.mxu0 0.0
    %1567 = vmatprep.subr.mxu0 0.0
    %1568 = vmatpush1.msra.mxu0 0.0
    %1569 = vmatprep.subr.mxu0 0.0
    %1570 = vmatpush1.msra.mxu0 0.0
    %1571 = vmatprep.subr.mxu0 0.0
    %1572 = vmatpush1.msra.mxu0 0.0
    %1573 = vmatprep.subr.mxu0 0.0
    %1574 = vmatpush1.msra.mxu0 0.0
    %1575 = vmatprep.subr.mxu0 0.0
    %1576 = vmatpush1.msra.mxu0 0.0
    %1577 = vmatprep.subr.mxu0 0.0
    %1578 = vmatpush1.msra.mxu0 0.0
    %1579 = vmatprep.subr.mxu0 0.0
    %1580 = vmatpush1.msra.mxu0 0.0
    %1581 = vmatprep.subr.mxu0 0.0
    %1582 = vmatpush1.msra.mxu0 0.0
    %1583 = vmatprep.subr.mxu0 0.0
    %1584 = vmatpush1.msra.mxu0 0.0
    %1585 = vmatprep.subr.mxu0 0.0
    %1586 = vmatpush1.msra.mxu0 0.0
    %1587 = vmatprep.subr.mxu0 0.0
    %1588 = vmatpush1.msra.mxu0 %v1553
    %1589 = vmatprep.subr.mxu0 0.0
    %1590 = vmatpush1.msra.mxu0 %v1552
    %1591 = vmatprep.subr.mxu0 0.0
    %1592 = vmatpush2.msra.mxu0 0.0
    %1593 = vmatprep.subr.mxu0 0.0
    %1594 = vmatpush2.msra.mxu0 0.0
    %1595 = vmatprep.subr.mxu0 0.0
    %1596 = vmatpush2.msra.mxu0 0.0
    %1597 = vmatprep.subr.mxu0 0.0
    %1598 = vmatpush2.msra.mxu0 0.0
    %1599 = vmatprep.subr.mxu0 0.0
    %1600 = vmatpush2.msra.mxu0 0.0
    %1601 = vmatprep.subr.mxu0 0.0
    %1602 = vmatpush2.msra.mxu0 0.0
    %1603 = vmatprep.subr.mxu0 0.0
    %1604 = vmatpush2.msra.mxu0 0.0
    %1605 = vmatprep.subr.mxu0 0.0
    %1606 = vmatpush2.msra.mxu0 0.0
    %1607 = vmatprep.subr.mxu0 0.0
    %1608 = vmatpush2.msra.mxu0 0.0
    %1609 = vmatprep.subr.mxu0 0.0
    %1610 = vmatpush2.msra.mxu0 0.0
    %1611 = vmatprep.subr.mxu0 0.0
    %1612 = vmatpush2.msra.mxu0 0.0
    %1613 = vmatprep.subr.mxu0 0.0
    %1614 = vmatpush2.msra.mxu0 0.0
    %1615 = vmatprep.subr.mxu0 0.0
    %1616 = vmatpush2.msra.mxu0 0.0
    %1617 = vmatprep.subr.mxu0 0.0
    %1618 = vmatpush2.msra.mxu0 0.0
    %1619 = vmatprep.subr.mxu0 0.0
    %1620 = vmatpush2.msra.mxu0 0.0
    %1621 = vmatprep.subr.mxu0 0.0
    %1622 = vmatpush2.msra.mxu0 0.0
    %1623 = vmatprep.mubr.f32.mxu0 0.0
    %1624 = vmatmul.mubr.f32.gmra.mxu0 %v1557
    %v1625 = vpop.f32.mrf.mxu0
    %v1626 = vadd.f32 0.0, %v1625
    %v1627 = vpop.f32.mrf.mxu0
    %1628 = vdwg.mxu0
    %v1629 = vadd.f32 %v1551, %v1626
    %v1630 = vld [vmem:[#allocation4 + $0xb0] sm:$0x1]
    %v1631 = vlaneseq
    %v1632 = vshrl.u32 %v1631, 7
    %v1633 = vsub.s32 0, %v1632
    %v1634 = vrot.slane %v1630, %v1633
    %v1635 = vadd.f32 %v1629, %v1634
    %vm1636 = vcmask 254976
    %v1637 = vsel %vm1636, %v1635, 0.0
    %1638 = vadd.xlane.f32.xlu0 %v1637
    %v1639 = vpop.xlane.xlu0 %1638
    %v1640 = vrcp.pop 32.0
    %v1641 = vmul.f32 %v1639, %v1640
    %v1642 = vsub.f32 %v1635, %v1641
    %v1643 = vmul.f32 %v1642, %v1642
    %v1644 = vsel %vm1636, %v1643, 0.0
    %1645 = vadd.xlane.f32.xlu0 %v1644
    %v1646 = vpop.xlane.xlu0 %1645
    %v1647 = vmul.f32 %v1646, %v1640
    %v1648 = vadd.f32 %v1647, 1e-05
    %v1649 = vrsqrt.pop %v1648
    %v1650 = vmul.f32 %v1642, %v1649
    %v1651 = vld [vmem:[#allocation4 + $0xb8] sm:$0x1]
    %v1652 = vlaneseq
    %v1653 = vshrl.u32 %v1652, 7
    %v1654 = vsub.s32 0, %v1653
    %v1655 = vrot.slane %v1651, %v1654
    %v1656 = vmul.f32 %v1650, %v1655
    %v1657 = vld [vmem:[#allocation4 + $0xc0] sm:$0x1]
    %v1658 = vlaneseq
    %v1659 = vshrl.u32 %v1658, 7
    %v1660 = vsub.s32 0, %v1659
    %v1661 = vrot.slane %v1657, %v1660
    %v1662 = vadd.f32 %v1656, %v1661
    %v1663 = vmax.f32 %v1662, 0.0
    %v1664 = vld [vmem:[#allocation4 + $0xc8] sm:$0xff]
    %v1665 = vld [vmem:[#allocation4 + $0xd0] sm:$0xff]
    %v1666 = vld [vmem:[#allocation4 + $0xd8] sm:$0xff]
    %v1667 = vld [vmem:[#allocation4 + $0xe0] sm:$0xff]
    %v1668 = vld [vmem:[#allocation4 + $0xe8] sm:$0x1]
    %v1669 = vlaneseq
    %v1670 = vshrl.u32 %v1669, 7
    %v1671 = vsub.s32 0, %v1670
    %v1672 = vrot.slane %v1668, %v1671
    %vm1673 = vcmask 261120
    %v1675 = vsel %vm1673, %v1663, 0
    %1677 = vmatprep.subr.mxu0 0.0
    %1678 = vmatpush1.msra.mxu0 0.0
    %1679 = vmatprep.subr.mxu0 0.0
    %1680 = vmatpush1.msra.mxu0 0.0
    %1681 = vmatprep.subr.mxu0 0.0
    %1682 = vmatpush1.msra.mxu0 0.0
    %1683 = vmatprep.subr.mxu0 0.0
    %1684 = vmatpush1.msra.mxu0 0.0
    %1685 = vmatprep.subr.mxu0 0.0
    %1686 = vmatpush1.msra.mxu0 0.0
    %1687 = vmatprep.subr.mxu0 0.0
    %1688 = vmatpush1.msra.mxu0 0.0
    %1689 = vmatprep.subr.mxu0 0.0
    %1690 = vmatpush1.msra.mxu0 0.0
    %1691 = vmatprep.subr.mxu0 0.0
    %1692 = vmatpush1.msra.mxu0 0.0
    %1693 = vmatprep.subr.mxu0 0.0
    %1694 = vmatpush1.msra.mxu0 0.0
    %1695 = vmatprep.subr.mxu0 0.0
    %1696 = vmatpush1.msra.mxu0 0.0
    %1697 = vmatprep.subr.mxu0 0.0
    %1698 = vmatpush1.msra.mxu0 0.0
    %1699 = vmatprep.subr.mxu0 0.0
    %1700 = vmatpush1.msra.mxu0 0.0
    %1701 = vmatprep.subr.mxu0 0.0
    %1702 = vmatpush1.msra.mxu0 %v1667
    %1703 = vmatprep.subr.mxu0 0.0
    %1704 = vmatpush1.msra.mxu0 %v1666
    %1705 = vmatprep.subr.mxu0 0.0
    %1706 = vmatpush1.msra.mxu0 %v1665
    %1707 = vmatprep.subr.mxu0 0.0
    %1708 = vmatpush1.msra.mxu0 %v1664
    %1709 = vmatprep.subr.mxu0 0.0
    %1710 = vmatpush2.msra.mxu0 0.0
    %1711 = vmatprep.subr.mxu0 0.0
    %1712 = vmatpush2.msra.mxu0 0.0
    %1713 = vmatprep.subr.mxu0 0.0
    %1714 = vmatpush2.msra.mxu0 0.0
    %1715 = vmatprep.subr.mxu0 0.0
    %1716 = vmatpush2.msra.mxu0 0.0
    %1717 = vmatprep.subr.mxu0 0.0
    %1718 = vmatpush2.msra.mxu0 0.0
    %1719 = vmatprep.subr.mxu0 0.0
    %1720 = vmatpush2.msra.mxu0 0.0
    %1721 = vmatprep.subr.mxu0 0.0
    %1722 = vmatpush2.msra.mxu0 0.0
    %1723 = vmatprep.subr.mxu0 0.0
    %1724 = vmatpush2.msra.mxu0 0.0
    %1725 = vmatprep.subr.mxu0 0.0
    %1726 = vmatpush2.msra.mxu0 0.0
    %1727 = vmatprep.subr.mxu0 0.0
    %1728 = vmatpush2.msra.mxu0 0.0
    %1729 = vmatprep.subr.mxu0 0.0
    %1730 = vmatpush2.msra.mxu0 0.0
    %1731 = vmatprep.subr.mxu0 0.0
    %1732 = vmatpush2.msra.mxu0 0.0
    %1733 = vmatprep.subr.mxu0 0.0
    %1734 = vmatpush2.msra.mxu0 0.0
    %1735 = vmatprep.subr.mxu0 0.0
    %1736 = vmatpush2.msra.mxu0 0.0
    %1737 = vmatprep.subr.mxu0 0.0
    %1738 = vmatpush2.msra.mxu0 0.0
    %1739 = vmatprep.subr.mxu0 0.0
    %1740 = vmatpush2.msra.mxu0 0.0
    %1741 = vmatprep.mubr.f32.mxu0 0.0
    %1742 = vmatmul.mubr.f32.gmra.mxu0 %v1675
    %v1743 = vpop.f32.mrf.mxu0
    %v1744 = vadd.f32 %v1672, %v1743
    %v1745 = vpop.f32.mrf.mxu0
    %1746 = vdwg.mxu0
    %v1747 = vsel %vm1636, %v1744, 0.0
    %1748 = vadd.xlane.f32.xlu0 %v1747
    %v1749 = vpop.xlane.xlu0 %1748
    %v1750 = vmul.f32 %v1749, %v1640
    %v1751 = vsub.f32 %v1744, %v1750
    %v1752 = vmul.f32 %v1751, %v1751
    %v1753 = vsel %vm1636, %v1752, 0.0
    %1754 = vadd.xlane.f32.xlu0 %v1753
    %v1755 = vpop.xlane.xlu0 %1754
    %v1756 = vmul.f32 %v1755, %v1640
    %v1757 = vadd.f32 %v1756, 1e-05
    %v1758 = vrsqrt.pop %v1757
    %v1759 = vmul.f32 %v1751, %v1758
    %v1760 = vld [vmem:[#allocation4 + $0xf0] sm:$0x1]
    %v1761 = vlaneseq
    %v1762 = vshrl.u32 %v1761, 7
    %v1763 = vsub.s32 0, %v1762
    %v1764 = vrot.slane %v1760, %v1763
    %v1765 = vmul.f32 %v1759, %v1764
    %v1766 = vld [vmem:[#allocation4 + $0xf8] sm:$0x1]
    %v1767 = vlaneseq
    %v1768 = vshrl.u32 %v1767, 7
    %v1769 = vsub.s32 0, %v1768
    %v1770 = vrot.slane %v1766, %v1769
    %v1771 = vadd.f32 %v1765, %v1770
    %v1772 = vmax.f32 %v1771, 0.0
    %v1773 = vld [vmem:[#allocation4 + $0x100] sm:$0xff]
    %v1774 = vld [vmem:[#allocation4 + $0x108] sm:$0xff]
    %v1775 = vld [vmem:[#allocation4 + $0x110] sm:$0xff]
    %v1776 = vld [vmem:[#allocation4 + $0x118] sm:$0xff]
    %v1777 = vld [vmem:[#allocation4 + $0x120] sm:$0x1]
    %v1778 = vlaneseq
    %v1779 = vshrl.u32 %v1778, 7
    %v1780 = vsub.s32 0, %v1779
    %v1781 = vrot.slane %v1777, %v1780
    %v1783 = vsel %vm1673, %v1772, 0
    %1785 = vmatprep.subr.mxu0 0.0
    %1786 = vmatpush1.msra.mxu0 0.0
    %1787 = vmatprep.subr.mxu0 0.0
    %1788 = vmatpush1.msra.mxu0 0.0
    %1789 = vmatprep.subr.mxu0 0.0
    %1790 = vmatpush1.msra.mxu0 0.0
    %1791 = vmatprep.subr.mxu0 0.0
    %1792 = vmatpush1.msra.mxu0 0.0
    %1793 = vmatprep.subr.mxu0 0.0
    %1794 = vmatpush1.msra.mxu0 0.0
    %1795 = vmatprep.subr.mxu0 0.0
    %1796 = vmatpush1.msra.mxu0 0.0
    %1797 = vmatprep.subr.mxu0 0.0
    %1798 = vmatpush1.msra.mxu0 0.0
    %1799 = vmatprep.subr.mxu0 0.0
    %1800 = vmatpush1.msra.mxu0 0.0
    %1801 = vmatprep.subr.mxu0 0.0
    %1802 = vmatpush1.msra.mxu0 0.0
    %1803 = vmatprep.subr.mxu0 0.0
    %1804 = vmatpush1.msra.mxu0 0.0
    %1805 = vmatprep.subr.mxu0 0.0
    %1806 = vmatpush1.msra.mxu0 0.0
    %1807 = vmatprep.subr.mxu0 0.0
    %1808 = vmatpush1.msra.mxu0 0.0
    %1809 = vmatprep.subr.mxu0 0.0
    %1810 = vmatpush1.msra.mxu0 %v1776
    %1811 = vmatprep.subr.mxu0 0.0
    %1812 = vmatpush1.msra.mxu0 %v1775
    %1813 = vmatprep.subr.mxu0 0.0
    %1814 = vmatpush1.msra.mxu0 %v1774
    %1815 = vmatprep.subr.mxu0 0.0
    %1816 = vmatpush1.msra.mxu0 %v1773
    %1817 = vmatprep.subr.mxu0 0.0
    %1818 = vmatpush2.msra.mxu0 0.0
    %1819 = vmatprep.subr.mxu0 0.0
    %1820 = vmatpush2.msra.mxu0 0.0
    %1821 = vmatprep.subr.mxu0 0.0
    %1822 = vmatpush2.msra.mxu0 0.0
    %1823 = vmatprep.subr.mxu0 0.0
    %1824 = vmatpush2.msra.mxu0 0.0
    %1825 = vmatprep.subr.mxu0 0.0
    %1826 = vmatpush2.msra.mxu0 0.0
    %1827 = vmatprep.subr.mxu0 0.0
    %1828 = vmatpush2.msra.mxu0 0.0
    %1829 = vmatprep.subr.mxu0 0.0
    %1830 = vmatpush2.msra.mxu0 0.0
    %1831 = vmatprep.subr.mxu0 0.0
    %1832 = vmatpush2.msra.mxu0 0.0
    %1833 = vmatprep.subr.mxu0 0.0
    %1834 = vmatpush2.msra.mxu0 0.0
    %1835 = vmatprep.subr.mxu0 0.0
    %1836 = vmatpush2.msra.mxu0 0.0
    %1837 = vmatprep.subr.mxu0 0.0
    %1838 = vmatpush2.msra.mxu0 0.0
    %1839 = vmatprep.subr.mxu0 0.0
    %1840 = vmatpush2.msra.mxu0 0.0
    %1841 = vmatprep.subr.mxu0 0.0
    %1842 = vmatpush2.msra.mxu0 0.0
    %1843 = vmatprep.subr.mxu0 0.0
    %1844 = vmatpush2.msra.mxu0 0.0
    %1845 = vmatprep.subr.mxu0 0.0
    %1846 = vmatpush2.msra.mxu0 0.0
    %1847 = vmatprep.subr.mxu0 0.0
    %1848 = vmatpush2.msra.mxu0 0.0
    %1849 = vmatprep.mubr.f32.mxu0 0.0
    %1850 = vmatmul.mubr.f32.gmra.mxu0 %v1783
    %v1851 = vpop.f32.mrf.mxu0
    %v1852 = vadd.f32 %v1781, %v1851
    %v1853 = vpop.f32.mrf.mxu0
    %1854 = vdwg.mxu0
    %v1855 = vmul.f32 %v1852, 0.5
    %v1856 = vmul.f32 %v1855, 1.442695
    %v1857 = vpow.pop %v1856
    %v1858 = vld [vmem:[#allocation6] sm:$0x3]
    %1860 = vrot.lane.b32.xlu0 %v1857, 124
    %v1861 = vpop.permute.xlu0 %1860
    %v1863 = vmul.f32 %v1858, %v1861
    %v1864 = vadd.f32 %v1852, %v1863
    %v1865 = vtanh.pop %v1864
    %1867 = vrot.lane.b32.xlu0 %v1865, 8
    %v1868 = vpop.permute.xlu0 %1867
    %vm1870 = vcmask 31744
    %v1871 = vsel %vm1870, %v1852, %v1857
    %v1872 = vsel %vm147, %v1871, %v1868
    %vm1873 = vcmask 91136
    %1874 = vst.msk [vmem:[%s3] sm:$0x3] %vm1873, %v1872
    // Predicated region
    $region26: #{actor_forward.1} parent=1 // pred_check
      _
    $region27: #{actor_forward.1} parent=1 // pred_check_branch
      %1876 = sbr.rel (0) target = $region29
    $region28: #{actor_forward.1} parent=1 // pred_region
      _
    $region29: #{actor_forward.1} parent=1 // pred_fallthru
      _
    // Predicated region
    $region30: #{actor_forward.1} parent=1 // pred_check
      _
    $region31: #{actor_forward.1} parent=1 // pred_check_branch
      %1878 = sbr.rel (0) target = $region33
    $region32: #{actor_forward.1} parent=1 // pred_region
      _
    $region33: #{actor_forward.1} parent=1 // pred_fallthru
      _
    %1879 = vsyncpa [#allocation3], 1
    %1880 = vsyncpa [#allocation5], 1

</llo_original>
